<compile_context>
chip_gen: v7x
topology: tpu7x:2x2x1
jax: 0.10.0
libtpu: 0.0.40
codegen_flags: <defaults>
</compile_context>

<pallas_src>
import functools

import numpy as np

import jax
import jax.numpy as jnp
from jax.experimental import pallas as pl
from jax.experimental.pallas import tpu as pltpu


_OVERALL_STRIDES = (2, 1, 2, 2)
_SUB_STRIDES = (2, 1, 2)


# ----------------------------------------------------------------------------
# Fused Pallas kernel: whole forward pass, one grid step per batch block
# ----------------------------------------------------------------------------
def _make_kernel(l_pad, l_valid, split):
    """x [1, bblk*l_pad, 36] -> out [1, bblk, n_out]; l_valid = original L."""

    def kernel(x_ref, w1, b1, w2, b2, w3, b3, w4, b4, o_ref):
        bblk = o_ref.shape[1]
        rows = x_ref.shape[1]                 # bblk * l_pad (multiple of 8)
        x = x_ref[0]                          # [rows, 36] f32, length on sublanes

        def conv_relu(z, w_ref, b_ref, dil):
            # A-trous conv (stride folded into dilation), constant row count.
            # Tap shifts via pltpu.roll (XLU) instead of unaligned sublane
            # slices; wrapped-in garbage tail rows are masked out at pooling.
            k_taps = w_ref.shape[0]
            acc = jnp.dot(z.astype(jnp.bfloat16), w_ref[0],
                          preferred_element_type=jnp.float32)
            for k in range(1, k_taps):
                zk = pltpu.roll(z, rows - k * dil, axis=0)     # zk[r] = z[r+k*dil]
                acc = acc + jnp.dot(zk.astype(jnp.bfloat16), w_ref[k],
                                    preferred_element_type=jnp.float32)
            return jnp.maximum(acc + b_ref[...], 0.0)
            # TODO(synk): v6e/v7x — stack tap pairs on the contraction axis to
            # halve MXU issues; measure (lane-concat cost vs MXU fill).

        # Layers 1-3 fused across overall1/overall2/sub1..sub6 (64/64/128 lanes).
        h1 = conv_relu(x, w1, b1, 1)          # 36  -> 64
        h2 = conv_relu(h1, w2, b2, 2)         # 64  -> 64
        h3 = conv_relu(h2, w3, b3, 2)         # 64  -> 128 (0:split overall, rest sub)
        # Overall-only layer 4; w4 zero-padded to cin=128, so no lane slice here.
        h4 = conv_relu(h3, w4, b4, 4)         # 128 -> 64  (X1 | X2)
        # TODO(synk): optionally compact rows by the accumulated dilation (4x)
        # before layer 4 / pooling for large L; at small L the kernel is ld/st
        # bound and the fusion + roll changes dominate.

        # Fused AdaptiveMaxPool1d(1): one masked reduce per path, one store.
        neg = -1e30                           # finite sentinel (ReLU outputs >= 0)
        pos = jax.lax.broadcasted_iota(jnp.int32, (l_pad, 1), 0)
        v4 = (pos < l_valid - 20) & ((pos & 7) == 0)   # overall path, dilation 8
        v3 = (pos < l_valid - 12) & ((pos & 3) == 0)   # sub path,     dilation 4
        p4 = jnp.max(jnp.where(v4, h4.reshape(bblk, l_pad, h4.shape[1]), neg),
                     axis=1)                            # [bblk, 64]  (X1, X2)
        p3 = jnp.max(jnp.where(v3, h3.reshape(bblk, l_pad, h3.shape[1]), neg),
                     axis=1)                            # [bblk, 128]
        # Single lane-dense store: (X1, X2, X_sub1..X_sub6)
        o_ref[0] = jnp.concatenate([p4, p3[:, split:]], axis=1)

    return kernel


@functools.partial(jax.jit, static_argnames=("batch_block",))
def my_cnn_model_forward(fused_params, X, batch_block=None):
    """X: [B, 36, L] (NCH) -> [B, 2*4*c1 + 6*2*c2], as My_cnn_model.forward."""
    B, C, L = X.shape
    assert C == 36, "model uses exactly channels 0..36"
    assert L >= 21, "sequence too short for the overall conv stack"

    # TODO(synk): accept channel-last input to drop this wrapper-side HBM
    # transpose (the only remaining op outside the fused kernel).
    x2 = jnp.transpose(X, (0, 2, 1))                        # [B, L, 36]
    l_pad = -(-L // 8) * 8                                  # clean sublane splits
    if l_pad != L:
        x2 = jnp.pad(x2, ((0, 0), (0, l_pad - L), (0, 0)))

    if batch_block is None:
        batch_block = max(1, min(B, 2048 // l_pad))         # bound per-step VMEM
    while B % batch_block:
        batch_block -= 1
    nb = B // batch_block
    rows = batch_block * l_pad
    x3 = x2.reshape(nb, rows, C)                            # block trailing dims = full

    w4 = fused_params["w4"]
    split = w4.shape[1]                                     # overall width after L3
    c3 = fused_params["b3"].shape[1]                        # fused layer-3 width
    w4p = jnp.pad(w4, ((0, 0), (0, c3 - split), (0, 0)))    # avoid in-kernel slice
    n_out = fused_params["b4"].shape[1] + (c3 - split)

    args = (x3,
            fused_params["w1"], fused_params["b1"],
            fused_params["w2"], fused_params["b2"],
            fused_params["w3"], fused_params["b3"],
            w4p, fused_params["b4"])
    full = lambda a: pl.BlockSpec(a.shape, lambda i, _n=a.ndim: (0,) * _n)
    out = pl.pallas_call(
        _make_kernel(l_pad, L, split),
        out_shape=jax.ShapeDtypeStruct((nb, batch_block, n_out), jnp.float32),
        grid=(nb,),
        in_specs=[pl.BlockSpec((1, rows, C), lambda i: (i, 0, 0))]
                 + [full(a) for a in args[1:]],
        out_specs=pl.BlockSpec((1, batch_block, n_out), lambda i: (i, 0, 0)),
        compiler_params=pltpu.CompilerParams(
            dimension_semantics=("parallel",),
            vmem_limit_bytes=32 * 1024 * 1024),
    )(*args)
    return out.reshape(B, n_out)


# ----------------------------------------------------------------------------
# Parameters: per-block params mirroring the torch module, + one-time fusion
# ----------------------------------------------------------------------------
def init_params(key, c_in1=36, c_in2=18, c1=8, c2=8):
    keys = iter(jax.random.split(key, 64))

    def conv(cout, cin, k):
        kw, kb = next(keys), next(keys)
        scale = 1.0 / float(np.sqrt(cin * k))
        return {"w": scale * jax.random.normal(kw, (cout, cin, k), jnp.float32),
                "b": scale * jax.random.normal(kb, (cout,), jnp.float32)}

    def overall_blk():
        return [conv(c1, c_in1, 5), conv(c1, c1, 3),
                conv(2 * c1, c1, 3), conv(4 * c1, 2 * c1, 3)]

    def sub_blk():
        return [conv(c2, c_in2, 5), conv(c2, c2, 3), conv(2 * c2, c2, 3)]

    return {"overall": [overall_blk(), overall_blk()],
            "sub": [sub_blk() for _ in range(6)]}


def _perms():
    def blk_perm(order):
        return np.concatenate([np.arange(3 * i, 3 * i + 3) for i in order])
    # Y1 = cat(X[0:3], X[30:33], X[6:9], X[24:27], X[12:15], X[18:21],
    #          X[3:6], X[33:36], X[9:12], X[27:30], X[15:18], X[21:24])
    perm1 = blk_perm([0, 10, 2, 8, 4, 6, 1, 11, 3, 9, 5, 7])
    # Y2 = cat(X[0:3], X[6:9], X[12:15], X[18:21], X[24:27], X[30:33],
    #          X[3:6], X[9:12], X[15:18], X[21:24], X[27:30], X[33:36])
    perm2 = blk_perm([0, 2, 4, 6, 8, 10, 1, 3, 5, 7, 9, 11])
    return perm1, perm2


def _fuse_first_layer(convs, cmaps, c_in_total):
    # Fold channel permutation/selection into layer-1 weights; stack all groups
    # on the output-channel (lane) axis.  Result: W [K, c_in_total, sum(cout)].
    K = convs[0]["w"].shape[2]
    total_out = sum(c["w"].shape[0] for c in convs)
    W = np.zeros((K, c_in_total, total_out), np.float32)
    bs, off = [], 0
    for conv, cmap in zip(convs, cmaps):
        cout = conv["w"].shape[0]
        wt = np.transpose(np.asarray(conv["w"]), (2, 1, 0))   # [K, cin_g, cout]
        W[:, np.asarray(cmap), off:off + cout] = wt
        bs.append(np.asarray(conv["b"]))
        off += cout
    return jnp.asarray(W), jnp.asarray(np.concatenate(bs)).reshape(1, -1)


def _fuse_block_diag(convs):
    # Stack per-group layers as block-diagonal weights: W [K, sum(cin), sum(cout)].
    K = convs[0]["w"].shape[2]
    total_in = sum(c["w"].shape[1] for c in convs)
    total_out = sum(c["w"].shape[0] for c in convs)
    W = np.zeros((K, total_in, total_out), np.float32)
    bs, ro, co = [], 0, 0
    for conv in convs:
        cout, cin, _ = conv["w"].shape
        wt = np.transpose(np.asarray(conv["w"]), (2, 1, 0))    # [K, cin, cout]
        W[:, ro:ro + cin, co:co + cout] = wt
        bs.append(np.asarray(conv["b"]))
        ro += cin
        co += cout
    return jnp.asarray(W), jnp.asarray(np.concatenate(bs)).reshape(1, -1)


def fuse_params(params):
    perm1, perm2 = _perms()
    ov, sb = params["overall"], params["sub"]
    sub_cmaps = [perm1[0:18], perm1[18:36], perm2[0:18], perm2[18:36],
                 np.concatenate([perm2[0:9], perm2[18:27]]),
                 np.concatenate([perm2[9:18], perm2[27:36]])]
    # Layer 1: fold Y1/Y2 permutations + per-sub channel selections into one
    # [5, 36, 64] weight (group order: overall1, overall2, sub1..sub6).
    w1, b1 = _fuse_first_layer([ov[0][0], ov[1][0]] + [s[0] for s in sb],
                               [perm1, perm2] + sub_cmaps, 36)
    # Layers 2/3: block-diagonal across the 8 groups (identical K/dilation).
    w2, b2 = _fuse_block_diag([ov[0][1], ov[1][1]] + [s[1] for s in sb])
    w3, b3 = _fuse_block_diag([ov[0][2], ov[1][2]] + [s[2] for s in sb])
    # Layer 4 exists only for the two overall groups (first lanes of h3).
    w4, b4 = _fuse_block_diag([ov[0][3], ov[1][3]])
    bf = lambda w: w.astype(jnp.bfloat16)            # MXU-native operands
    return dict(w1=bf(w1), b1=b1, w2=bf(w2), b2=b2, w3=bf(w3), b3=b3,
                w4=bf(w4), b4=b4)


# ----------------------------------------------------------------------------
# Pure-XLA reference of the torch module (for the self-check only)
# ----------------------------------------------------------------------------
def _conv1d_relu_ref(x, w, b, stride):
    y = jax.lax.conv_general_dilated(
        x, w, window_strides=(stride,), padding="VALID",
        dimension_numbers=("NCH", "OIH", "NCH"),
        precision=jax.lax.Precision.HIGHEST)
    return jnp.maximum(y + b[None, :, None], 0.0)


def _ref_block(x, convs, strides):
    h = x
    for conv, s in zip(convs, strides):
        h = _conv1d_relu_ref(h, conv["w"], conv["b"], s)
    return jnp.max(h, axis=-1)           # AdaptiveMaxPool1d(1) + Flatten


def reference_forward(params, X):
    s = lambda a, b: X[:, a:b]
    Y1 = jnp.concatenate([s(0, 3), s(30, 33), s(6, 9), s(24, 27), s(12, 15),
                          s(18, 21), s(3, 6), s(33, 36), s(9, 12), s(27, 30),
                          s(15, 18), s(21, 24)], axis=1)
    Y2 = jnp.concatenate([s(0, 3), s(6, 9), s(12, 15), s(18, 21), s(24, 27),
                          s(30, 33), s(3, 6), s(9, 12), s(15, 18), s(21, 24),
                          s(27, 30), s(33, 36)], axis=1)
    X1 = _ref_block(Y1, params["overall"][0], _OVERALL_STRIDES)
    X2 = _ref_block(Y2, params["overall"][1], _OVERALL_STRIDES)
    Xs1 = _ref_block(Y1[:, 0:18], params["sub"][0], _SUB_STRIDES)
    Xs2 = _ref_block(Y1[:, 18:36], params["sub"][1], _SUB_STRIDES)
    Xs3 = _ref_block(Y2[:, 0:18], params["sub"][2], _SUB_STRIDES)
    Xs4 = _ref_block(Y2[:, 18:36], params["sub"][3], _SUB_STRIDES)
    Xs5 = _ref_block(jnp.concatenate([Y2[:, 0:9], Y2[:, 18:27]], axis=1),
                     params["sub"][4], _SUB_STRIDES)
    Xs6 = _ref_block(jnp.concatenate([Y2[:, 9:18], Y2[:, 27:36]], axis=1),
                     params["sub"][5], _SUB_STRIDES)
    return jnp.concatenate([X1, X2, Xs1, Xs2, Xs3, Xs4, Xs5, Xs6], axis=1)


if __name__ == "__main__":
    key = jax.random.PRNGKey(0)
    kp, kx = jax.random.split(key)

    B, C, L = 2, 36, 64                 # forward() slices channels 0..36
    params = init_params(kp)            # per-block params (mirrors torch module)
    fused = fuse_params(params)         # one-time permutation folding + stacking
    X = jax.random.normal(kx, (B, C, L), jnp.float32)

    # batch_block=1 exercises the parallel batch grid axis (2 grid steps).
    Y = my_cnn_model_forward(fused, X, batch_block=1)
    Y = jax.block_until_ready(Y)

    assert Y.shape == (B, 160), Y.shape
    assert bool(jnp.isfinite(Y).all())

    # correctness self-check against the pure-XLA (f32 HIGHEST) reference;
    # kernel matmuls run in bf16, so use a relative + absolute tolerance.
    Y_ref = reference_forward(params, X)
    ok = bool(jnp.all(jnp.abs(Y - Y_ref) <= 2e-2 + 5e-2 * jnp.abs(Y_ref)))
    assert ok, "mismatch vs reference"

    print("KERNEL_OK")
</pallas_src>

<mosaic_0001>
module attributes {stable_mosaic.version = 11 : i64} {
  func.func @kernel(%arg0: i32, %arg1: memref<1x64x36xf32, #tpu.memory_space<vmem>>, %arg2: memref<5x36x64xbf16, #tpu.memory_space<vmem>>, %arg3: memref<1x64xf32, #tpu.memory_space<vmem>>, %arg4: memref<3x64x64xbf16, #tpu.memory_space<vmem>>, %arg5: memref<1x64xf32, #tpu.memory_space<vmem>>, %arg6: memref<3x64x128xbf16, #tpu.memory_space<vmem>>, %arg7: memref<1x128xf32, #tpu.memory_space<vmem>>, %arg8: memref<3x128x64xbf16, #tpu.memory_space<vmem>>, %arg9: memref<1x64xf32, #tpu.memory_space<vmem>>, %arg10: memref<1x1x160xf32, #tpu.memory_space<vmem>>) attributes {dimension_semantics = [#tpu.dimension_semantics<parallel>], iteration_bounds = array<i64: 2>, scalar_prefetch = 0 : i64, scratch_operands = 0 : i64, tpu.core_type = #tpu.core_type<tc>, window_params = [{transform_indices = @transform_0, window_bounds = array<i64: 1, 64, 36>}, {pipeline_mode = #tpu.pipeline_mode<synchronous>, transform_indices = @transform_1, window_bounds = array<i64: 5, 36, 64>}, {pipeline_mode = #tpu.pipeline_mode<synchronous>, transform_indices = @transform_2, window_bounds = array<i64: 1, 64>}, {pipeline_mode = #tpu.pipeline_mode<synchronous>, transform_indices = @transform_3, window_bounds = array<i64: 3, 64, 64>}, {pipeline_mode = #tpu.pipeline_mode<synchronous>, transform_indices = @transform_4, window_bounds = array<i64: 1, 64>}, {pipeline_mode = #tpu.pipeline_mode<synchronous>, transform_indices = @transform_5, window_bounds = array<i64: 3, 64, 128>}, {pipeline_mode = #tpu.pipeline_mode<synchronous>, transform_indices = @transform_6, window_bounds = array<i64: 1, 128>}, {pipeline_mode = #tpu.pipeline_mode<synchronous>, transform_indices = @transform_7, window_bounds = array<i64: 3, 128, 64>}, {pipeline_mode = #tpu.pipeline_mode<synchronous>, transform_indices = @transform_8, window_bounds = array<i64: 1, 64>}, {transform_indices = @transform_9, window_bounds = array<i64: 1, 1, 160>}]} {
    %c0 = arith.constant 0 : index
    %c0_0 = arith.constant 0 : index
    %c0_1 = arith.constant 0 : index
    %0 = vector.load %arg1[%c0, %c0_0, %c0_1] : memref<1x64x36xf32, #tpu.memory_space<vmem>>, vector<1x64x36xf32>
    %1 = vector.shape_cast %0 : vector<1x64x36xf32> to vector<64x36xf32>
    %2 = arith.truncf %1 : vector<64x36xf32> to vector<64x36xbf16>
    %c0_2 = arith.constant 0 : index
    %c0_3 = arith.constant 0 : index
    %c0_4 = arith.constant 0 : index
    %3 = vector.load %arg2[%c0_2, %c0_3, %c0_4] : memref<5x36x64xbf16, #tpu.memory_space<vmem>>, vector<1x36x64xbf16>
    %4 = vector.shape_cast %3 : vector<1x36x64xbf16> to vector<36x64xbf16>
    %cst = arith.constant dense<0.000000e+00> : vector<64x64xf32>
    %5 = tpu.matmul %2, %4, %cst {dimension_numbers = #tpu.dot_dimension_numbers<[1], [0], [0], [1], [0, 0, 1, 1], [], []>} : vector<64x36xbf16>, vector<36x64xbf16>, vector<64x64xf32> -> vector<64x64xf32>
    %c63_i32 = arith.constant 63 : i32
    %6 = tpu.dynamic_rotate %1 by %c63_i32 dim 0 : vector<64x36xf32>, i32 -> vector<64x36xf32>
    %7 = arith.truncf %6 : vector<64x36xf32> to vector<64x36xbf16>
    %c1 = arith.constant 1 : index
    %c0_5 = arith.constant 0 : index
    %c0_6 = arith.constant 0 : index
    %8 = vector.load %arg2[%c1, %c0_5, %c0_6] : memref<5x36x64xbf16, #tpu.memory_space<vmem>>, vector<1x36x64xbf16>
    %9 = vector.shape_cast %8 : vector<1x36x64xbf16> to vector<36x64xbf16>
    %cst_7 = arith.constant dense<0.000000e+00> : vector<64x64xf32>
    %10 = tpu.matmul %7, %9, %cst_7 {dimension_numbers = #tpu.dot_dimension_numbers<[1], [0], [0], [1], [0, 0, 1, 1], [], []>} : vector<64x36xbf16>, vector<36x64xbf16>, vector<64x64xf32> -> vector<64x64xf32>
    %11 = arith.addf %5, %10 : vector<64x64xf32>
    %c62_i32 = arith.constant 62 : i32
    %12 = tpu.dynamic_rotate %1 by %c62_i32 dim 0 : vector<64x36xf32>, i32 -> vector<64x36xf32>
    %13 = arith.truncf %12 : vector<64x36xf32> to vector<64x36xbf16>
    %c2 = arith.constant 2 : index
    %c0_8 = arith.constant 0 : index
    %c0_9 = arith.constant 0 : index
    %14 = vector.load %arg2[%c2, %c0_8, %c0_9] : memref<5x36x64xbf16, #tpu.memory_space<vmem>>, vector<1x36x64xbf16>
    %15 = vector.shape_cast %14 : vector<1x36x64xbf16> to vector<36x64xbf16>
    %cst_10 = arith.constant dense<0.000000e+00> : vector<64x64xf32>
    %16 = tpu.matmul %13, %15, %cst_10 {dimension_numbers = #tpu.dot_dimension_numbers<[1], [0], [0], [1], [0, 0, 1, 1], [], []>} : vector<64x36xbf16>, vector<36x64xbf16>, vector<64x64xf32> -> vector<64x64xf32>
    %17 = arith.addf %11, %16 : vector<64x64xf32>
    %c61_i32 = arith.constant 61 : i32
    %18 = tpu.dynamic_rotate %1 by %c61_i32 dim 0 : vector<64x36xf32>, i32 -> vector<64x36xf32>
    %19 = arith.truncf %18 : vector<64x36xf32> to vector<64x36xbf16>
    %c3 = arith.constant 3 : index
    %c0_11 = arith.constant 0 : index
    %c0_12 = arith.constant 0 : index
    %20 = vector.load %arg2[%c3, %c0_11, %c0_12] : memref<5x36x64xbf16, #tpu.memory_space<vmem>>, vector<1x36x64xbf16>
    %21 = vector.shape_cast %20 : vector<1x36x64xbf16> to vector<36x64xbf16>
    %cst_13 = arith.constant dense<0.000000e+00> : vector<64x64xf32>
    %22 = tpu.matmul %19, %21, %cst_13 {dimension_numbers = #tpu.dot_dimension_numbers<[1], [0], [0], [1], [0, 0, 1, 1], [], []>} : vector<64x36xbf16>, vector<36x64xbf16>, vector<64x64xf32> -> vector<64x64xf32>
    %23 = arith.addf %17, %22 : vector<64x64xf32>
    %c60_i32 = arith.constant 60 : i32
    %24 = tpu.dynamic_rotate %1 by %c60_i32 dim 0 : vector<64x36xf32>, i32 -> vector<64x36xf32>
    %25 = arith.truncf %24 : vector<64x36xf32> to vector<64x36xbf16>
    %c4 = arith.constant 4 : index
    %c0_14 = arith.constant 0 : index
    %c0_15 = arith.constant 0 : index
    %26 = vector.load %arg2[%c4, %c0_14, %c0_15] : memref<5x36x64xbf16, #tpu.memory_space<vmem>>, vector<1x36x64xbf16>
    %27 = vector.shape_cast %26 : vector<1x36x64xbf16> to vector<36x64xbf16>
    %cst_16 = arith.constant dense<0.000000e+00> : vector<64x64xf32>
    %28 = tpu.matmul %25, %27, %cst_16 {dimension_numbers = #tpu.dot_dimension_numbers<[1], [0], [0], [1], [0, 0, 1, 1], [], []>} : vector<64x36xbf16>, vector<36x64xbf16>, vector<64x64xf32> -> vector<64x64xf32>
    %29 = arith.addf %23, %28 : vector<64x64xf32>
    %c0_17 = arith.constant 0 : index
    %c0_18 = arith.constant 0 : index
    %30 = vector.load %arg3[%c0_17, %c0_18] : memref<1x64xf32, #tpu.memory_space<vmem>>, vector<1x64xf32>
    %31 = vector.broadcast %30 : vector<1x64xf32> to vector<64x64xf32>
    %32 = arith.addf %29, %31 : vector<64x64xf32>
    %cst_19 = arith.constant 0.000000e+00 : f32
    %33 = vector.broadcast %cst_19 : f32 to vector<64x64xf32>
    %34 = arith.maximumf %32, %33 : vector<64x64xf32>
    %35 = arith.truncf %34 : vector<64x64xf32> to vector<64x64xbf16>
    %c0_20 = arith.constant 0 : index
    %c0_21 = arith.constant 0 : index
    %c0_22 = arith.constant 0 : index
    %36 = vector.load %arg4[%c0_20, %c0_21, %c0_22] : memref<3x64x64xbf16, #tpu.memory_space<vmem>>, vector<1x64x64xbf16>
    %37 = vector.shape_cast %36 : vector<1x64x64xbf16> to vector<64x64xbf16>
    %cst_23 = arith.constant dense<0.000000e+00> : vector<64x64xf32>
    %38 = tpu.matmul %35, %37, %cst_23 {dimension_numbers = #tpu.dot_dimension_numbers<[1], [0], [0], [1], [0, 0, 1, 1], [], []>} : vector<64x64xbf16>, vector<64x64xbf16>, vector<64x64xf32> -> vector<64x64xf32>
    %c62_i32_24 = arith.constant 62 : i32
    %39 = tpu.dynamic_rotate %34 by %c62_i32_24 dim 0 : vector<64x64xf32>, i32 -> vector<64x64xf32>
    %40 = arith.truncf %39 : vector<64x64xf32> to vector<64x64xbf16>
    %c1_25 = arith.constant 1 : index
    %c0_26 = arith.constant 0 : index
    %c0_27 = arith.constant 0 : index
    %41 = vector.load %arg4[%c1_25, %c0_26, %c0_27] : memref<3x64x64xbf16, #tpu.memory_space<vmem>>, vector<1x64x64xbf16>
    %42 = vector.shape_cast %41 : vector<1x64x64xbf16> to vector<64x64xbf16>
    %cst_28 = arith.constant dense<0.000000e+00> : vector<64x64xf32>
    %43 = tpu.matmul %40, %42, %cst_28 {dimension_numbers = #tpu.dot_dimension_numbers<[1], [0], [0], [1], [0, 0, 1, 1], [], []>} : vector<64x64xbf16>, vector<64x64xbf16>, vector<64x64xf32> -> vector<64x64xf32>
    %44 = arith.addf %38, %43 : vector<64x64xf32>
    %c60_i32_29 = arith.constant 60 : i32
    %45 = tpu.dynamic_rotate %34 by %c60_i32_29 dim 0 : vector<64x64xf32>, i32 -> vector<64x64xf32>
    %46 = arith.truncf %45 : vector<64x64xf32> to vector<64x64xbf16>
    %c2_30 = arith.constant 2 : index
    %c0_31 = arith.constant 0 : index
    %c0_32 = arith.constant 0 : index
    %47 = vector.load %arg4[%c2_30, %c0_31, %c0_32] : memref<3x64x64xbf16, #tpu.memory_space<vmem>>, vector<1x64x64xbf16>
    %48 = vector.shape_cast %47 : vector<1x64x64xbf16> to vector<64x64xbf16>
    %cst_33 = arith.constant dense<0.000000e+00> : vector<64x64xf32>
    %49 = tpu.matmul %46, %48, %cst_33 {dimension_numbers = #tpu.dot_dimension_numbers<[1], [0], [0], [1], [0, 0, 1, 1], [], []>} : vector<64x64xbf16>, vector<64x64xbf16>, vector<64x64xf32> -> vector<64x64xf32>
    %50 = arith.addf %44, %49 : vector<64x64xf32>
    %c0_34 = arith.constant 0 : index
    %c0_35 = arith.constant 0 : index
    %51 = vector.load %arg5[%c0_34, %c0_35] : memref<1x64xf32, #tpu.memory_space<vmem>>, vector<1x64xf32>
    %52 = vector.broadcast %51 : vector<1x64xf32> to vector<64x64xf32>
    %53 = arith.addf %50, %52 : vector<64x64xf32>
    %cst_36 = arith.constant 0.000000e+00 : f32
    %54 = vector.broadcast %cst_36 : f32 to vector<64x64xf32>
    %55 = arith.maximumf %53, %54 : vector<64x64xf32>
    %56 = arith.truncf %55 : vector<64x64xf32> to vector<64x64xbf16>
    %c0_37 = arith.constant 0 : index
    %c0_38 = arith.constant 0 : index
    %c0_39 = arith.constant 0 : index
    %57 = vector.load %arg6[%c0_37, %c0_38, %c0_39] : memref<3x64x128xbf16, #tpu.memory_space<vmem>>, vector<1x64x128xbf16>
    %58 = vector.shape_cast %57 : vector<1x64x128xbf16> to vector<64x128xbf16>
    %cst_40 = arith.constant dense<0.000000e+00> : vector<64x128xf32>
    %59 = tpu.matmul %56, %58, %cst_40 {dimension_numbers = #tpu.dot_dimension_numbers<[1], [0], [0], [1], [0, 0, 1, 1], [], []>} : vector<64x64xbf16>, vector<64x128xbf16>, vector<64x128xf32> -> vector<64x128xf32>
    %c62_i32_41 = arith.constant 62 : i32
    %60 = tpu.dynamic_rotate %55 by %c62_i32_41 dim 0 : vector<64x64xf32>, i32 -> vector<64x64xf32>
    %61 = arith.truncf %60 : vector<64x64xf32> to vector<64x64xbf16>
    %c1_42 = arith.constant 1 : index
    %c0_43 = arith.constant 0 : index
    %c0_44 = arith.constant 0 : index
    %62 = vector.load %arg6[%c1_42, %c0_43, %c0_44] : memref<3x64x128xbf16, #tpu.memory_space<vmem>>, vector<1x64x128xbf16>
    %63 = vector.shape_cast %62 : vector<1x64x128xbf16> to vector<64x128xbf16>
    %cst_45 = arith.constant dense<0.000000e+00> : vector<64x128xf32>
    %64 = tpu.matmul %61, %63, %cst_45 {dimension_numbers = #tpu.dot_dimension_numbers<[1], [0], [0], [1], [0, 0, 1, 1], [], []>} : vector<64x64xbf16>, vector<64x128xbf16>, vector<64x128xf32> -> vector<64x128xf32>
    %65 = arith.addf %59, %64 : vector<64x128xf32>
    %c60_i32_46 = arith.constant 60 : i32
    %66 = tpu.dynamic_rotate %55 by %c60_i32_46 dim 0 : vector<64x64xf32>, i32 -> vector<64x64xf32>
    %67 = arith.truncf %66 : vector<64x64xf32> to vector<64x64xbf16>
    %c2_47 = arith.constant 2 : index
    %c0_48 = arith.constant 0 : index
    %c0_49 = arith.constant 0 : index
    %68 = vector.load %arg6[%c2_47, %c0_48, %c0_49] : memref<3x64x128xbf16, #tpu.memory_space<vmem>>, vector<1x64x128xbf16>
    %69 = vector.shape_cast %68 : vector<1x64x128xbf16> to vector<64x128xbf16>
    %cst_50 = arith.constant dense<0.000000e+00> : vector<64x128xf32>
    %70 = tpu.matmul %67, %69, %cst_50 {dimension_numbers = #tpu.dot_dimension_numbers<[1], [0], [0], [1], [0, 0, 1, 1], [], []>} : vector<64x64xbf16>, vector<64x128xbf16>, vector<64x128xf32> -> vector<64x128xf32>
    %71 = arith.addf %65, %70 : vector<64x128xf32>
    %c0_51 = arith.constant 0 : index
    %c0_52 = arith.constant 0 : index
    %72 = vector.load %arg7[%c0_51, %c0_52] : memref<1x128xf32, #tpu.memory_space<vmem>>, vector<1x128xf32>
    %73 = vector.broadcast %72 : vector<1x128xf32> to vector<64x128xf32>
    %74 = arith.addf %71, %73 : vector<64x128xf32>
    %cst_53 = arith.constant 0.000000e+00 : f32
    %75 = vector.broadcast %cst_53 : f32 to vector<64x128xf32>
    %76 = arith.maximumf %74, %75 : vector<64x128xf32>
    %77 = arith.truncf %76 : vector<64x128xf32> to vector<64x128xbf16>
    %c0_54 = arith.constant 0 : index
    %c0_55 = arith.constant 0 : index
    %c0_56 = arith.constant 0 : index
    %78 = vector.load %arg8[%c0_54, %c0_55, %c0_56] : memref<3x128x64xbf16, #tpu.memory_space<vmem>>, vector<1x128x64xbf16>
    %79 = vector.shape_cast %78 : vector<1x128x64xbf16> to vector<128x64xbf16>
    %cst_57 = arith.constant dense<0.000000e+00> : vector<64x64xf32>
    %80 = tpu.matmul %77, %79, %cst_57 {dimension_numbers = #tpu.dot_dimension_numbers<[1], [0], [0], [1], [0, 0, 1, 1], [], []>} : vector<64x128xbf16>, vector<128x64xbf16>, vector<64x64xf32> -> vector<64x64xf32>
    %c60_i32_58 = arith.constant 60 : i32
    %81 = tpu.dynamic_rotate %76 by %c60_i32_58 dim 0 : vector<64x128xf32>, i32 -> vector<64x128xf32>
    %82 = arith.truncf %81 : vector<64x128xf32> to vector<64x128xbf16>
    %c1_59 = arith.constant 1 : index
    %c0_60 = arith.constant 0 : index
    %c0_61 = arith.constant 0 : index
    %83 = vector.load %arg8[%c1_59, %c0_60, %c0_61] : memref<3x128x64xbf16, #tpu.memory_space<vmem>>, vector<1x128x64xbf16>
    %84 = vector.shape_cast %83 : vector<1x128x64xbf16> to vector<128x64xbf16>
    %cst_62 = arith.constant dense<0.000000e+00> : vector<64x64xf32>
    %85 = tpu.matmul %82, %84, %cst_62 {dimension_numbers = #tpu.dot_dimension_numbers<[1], [0], [0], [1], [0, 0, 1, 1], [], []>} : vector<64x128xbf16>, vector<128x64xbf16>, vector<64x64xf32> -> vector<64x64xf32>
    %86 = arith.addf %80, %85 : vector<64x64xf32>
    %c56_i32 = arith.constant 56 : i32
    %87 = tpu.dynamic_rotate %76 by %c56_i32 dim 0 : vector<64x128xf32>, i32 -> vector<64x128xf32>
    %88 = arith.truncf %87 : vector<64x128xf32> to vector<64x128xbf16>
    %c2_63 = arith.constant 2 : index
    %c0_64 = arith.constant 0 : index
    %c0_65 = arith.constant 0 : index
    %89 = vector.load %arg8[%c2_63, %c0_64, %c0_65] : memref<3x128x64xbf16, #tpu.memory_space<vmem>>, vector<1x128x64xbf16>
    %90 = vector.shape_cast %89 : vector<1x128x64xbf16> to vector<128x64xbf16>
    %cst_66 = arith.constant dense<0.000000e+00> : vector<64x64xf32>
    %91 = tpu.matmul %88, %90, %cst_66 {dimension_numbers = #tpu.dot_dimension_numbers<[1], [0], [0], [1], [0, 0, 1, 1], [], []>} : vector<64x128xbf16>, vector<128x64xbf16>, vector<64x64xf32> -> vector<64x64xf32>
    %92 = arith.addf %86, %91 : vector<64x64xf32>
    %c0_67 = arith.constant 0 : index
    %c0_68 = arith.constant 0 : index
    %93 = vector.load %arg9[%c0_67, %c0_68] : memref<1x64xf32, #tpu.memory_space<vmem>>, vector<1x64xf32>
    %94 = vector.broadcast %93 : vector<1x64xf32> to vector<64x64xf32>
    %95 = arith.addf %92, %94 : vector<64x64xf32>
    %cst_69 = arith.constant 0.000000e+00 : f32
    %96 = vector.broadcast %cst_69 : f32 to vector<64x64xf32>
    %97 = arith.maximumf %95, %96 : vector<64x64xf32>
    %98 = tpu.iota {dimensions = array<i32: 0>} : vector<64x1xi32>
    %c44_i32 = arith.constant 44 : i32
    %99 = vector.broadcast %c44_i32 : i32 to vector<64x1xi32>
    %100 = arith.cmpi slt, %98, %99 : vector<64x1xi32>
    %c7_i32 = arith.constant 7 : i32
    %101 = vector.broadcast %c7_i32 : i32 to vector<64x1xi32>
    %102 = arith.andi %98, %101 : vector<64x1xi32>
    %c0_i32 = arith.constant 0 : i32
    %103 = vector.broadcast %c0_i32 : i32 to vector<64x1xi32>
    %104 = arith.cmpi eq, %102, %103 : vector<64x1xi32>
    %105 = arith.andi %100, %104 : vector<64x1xi1>
    %c52_i32 = arith.constant 52 : i32
    %106 = vector.broadcast %c52_i32 : i32 to vector<64x1xi32>
    %107 = arith.cmpi slt, %98, %106 : vector<64x1xi32>
    %c3_i32 = arith.constant 3 : i32
    %108 = vector.broadcast %c3_i32 : i32 to vector<64x1xi32>
    %109 = arith.andi %98, %108 : vector<64x1xi32>
    %c0_i32_70 = arith.constant 0 : i32
    %110 = vector.broadcast %c0_i32_70 : i32 to vector<64x1xi32>
    %111 = arith.cmpi eq, %109, %110 : vector<64x1xi32>
    %112 = arith.andi %107, %111 : vector<64x1xi1>
    %113 = vector.shape_cast %97 : vector<64x64xf32> to vector<1x64x64xf32>
    %cst_71 = arith.constant -1.000000e+30 : f32
    %114 = vector.shape_cast %105 : vector<64x1xi1> to vector<1x64x1xi1>
    %115 = vector.broadcast %114 : vector<1x64x1xi1> to vector<1x64x64xi1>
    %116 = vector.broadcast %cst_71 : f32 to vector<1x64x64xf32>
    %117 = arith.select %115, %113, %116 : vector<1x64x64xi1>, vector<1x64x64xf32>
    %cst_72 = arith.constant dense<0xFF800000> : vector<1x64xf32>
    %118 = vector.multi_reduction <maximumf>, %117, %cst_72 [1] : vector<1x64x64xf32> to vector<1x64xf32>
    %119 = vector.shape_cast %76 : vector<64x128xf32> to vector<1x64x128xf32>
    %cst_73 = arith.constant -1.000000e+30 : f32
    %120 = vector.shape_cast %112 : vector<64x1xi1> to vector<1x64x1xi1>
    %121 = vector.broadcast %120 : vector<1x64x1xi1> to vector<1x64x128xi1>
    %122 = vector.broadcast %cst_73 : f32 to vector<1x64x128xf32>
    %123 = arith.select %121, %119, %122 : vector<1x64x128xi1>, vector<1x64x128xf32>
    %cst_74 = arith.constant dense<0xFF800000> : vector<1x128xf32>
    %124 = vector.multi_reduction <maximumf>, %123, %cst_74 [1] : vector<1x64x128xf32> to vector<1x128xf32>
    %125 = vector.extract_strided_slice %124 {offsets = [0, 32], sizes = [1, 96], strides = [1, 1]} : vector<1x128xf32> to vector<1x96xf32>
    %126 = tpu.concatenate %118, %125 in 1 : vector<1x64xf32>, vector<1x96xf32> -> vector<1x160xf32>
    %c0_75 = arith.constant 0 : index
    %c0_76 = arith.constant 0 : index
    %c0_77 = arith.constant 0 : index
    %127 = vector.load %arg10[%c0_75, %c0_76, %c0_77] : memref<1x1x160xf32, #tpu.memory_space<vmem>>, vector<1x1x160xf32>
    %128 = vector.shape_cast %127 : vector<1x1x160xf32> to vector<1x160xf32>
    %129 = vector.shape_cast %126 : vector<1x160xf32> to vector<1x1x160xf32>
    tpu.vector_store %arg10[%c0_75, %c0_76, %c0_77], %129 {strides = array<i32>} : memref<1x1x160xf32, #tpu.memory_space<vmem>>, vector<1x1x160xf32>,
    return
  }
  func.func @transform_0(%arg0: i32) -> (i32, i32, i32) {
    %c0_i32 = arith.constant 0 : i32
    %c0_i32_0 = arith.constant 0 : i32
    %c0_i32_1 = arith.constant 0 : i32
    return %arg0, %c0_i32, %c0_i32_0 : i32, i32, i32
  }
  func.func @transform_1(%arg0: i32) -> (i32, i32, i32) {
    %c0_i32 = arith.constant 0 : i32
    %c0_i32_0 = arith.constant 0 : i32
    %c0_i32_1 = arith.constant 0 : i32
    %c0_i32_2 = arith.constant 0 : i32
    return %c0_i32, %c0_i32_0, %c0_i32_1 : i32, i32, i32
  }
  func.func @transform_2(%arg0: i32) -> (i32, i32) {
    %c0_i32 = arith.constant 0 : i32
    %c0_i32_0 = arith.constant 0 : i32
    %c0_i32_1 = arith.constant 0 : i32
    return %c0_i32, %c0_i32_0 : i32, i32
  }
  func.func @transform_3(%arg0: i32) -> (i32, i32, i32) {
    %c0_i32 = arith.constant 0 : i32
    %c0_i32_0 = arith.constant 0 : i32
    %c0_i32_1 = arith.constant 0 : i32
    %c0_i32_2 = arith.constant 0 : i32
    return %c0_i32, %c0_i32_0, %c0_i32_1 : i32, i32, i32
  }
  func.func @transform_4(%arg0: i32) -> (i32, i32) {
    %c0_i32 = arith.constant 0 : i32
    %c0_i32_0 = arith.constant 0 : i32
    %c0_i32_1 = arith.constant 0 : i32
    return %c0_i32, %c0_i32_0 : i32, i32
  }
  func.func @transform_5(%arg0: i32) -> (i32, i32, i32) {
    %c0_i32 = arith.constant 0 : i32
    %c0_i32_0 = arith.constant 0 : i32
    %c0_i32_1 = arith.constant 0 : i32
    %c0_i32_2 = arith.constant 0 : i32
    return %c0_i32, %c0_i32_0, %c0_i32_1 : i32, i32, i32
  }
  func.func @transform_6(%arg0: i32) -> (i32, i32) {
    %c0_i32 = arith.constant 0 : i32
    %c0_i32_0 = arith.constant 0 : i32
    %c0_i32_1 = arith.constant 0 : i32
    return %c0_i32, %c0_i32_0 : i32, i32
  }
  func.func @transform_7(%arg0: i32) -> (i32, i32, i32) {
    %c0_i32 = arith.constant 0 : i32
    %c0_i32_0 = arith.constant 0 : i32
    %c0_i32_1 = arith.constant 0 : i32
    %c0_i32_2 = arith.constant 0 : i32
    return %c0_i32, %c0_i32_0, %c0_i32_1 : i32, i32, i32
  }
  func.func @transform_8(%arg0: i32) -> (i32, i32) {
    %c0_i32 = arith.constant 0 : i32
    %c0_i32_0 = arith.constant 0 : i32
    %c0_i32_1 = arith.constant 0 : i32
    return %c0_i32, %c0_i32_0 : i32, i32
  }
  func.func @transform_9(%arg0: i32) -> (i32, i32, i32) {
    %c0_i32 = arith.constant 0 : i32
    %c0_i32_0 = arith.constant 0 : i32
    %c0_i32_1 = arith.constant 0 : i32
    return %arg0, %c0_i32, %c0_i32_0 : i32, i32, i32
  }
}

</mosaic_0001>

<llo_original>
// kernel: my_cnn_model_forward.1
$region0: #{my_cnn_model_forward.1}
  #allocation0 [shape = 'u32[]', space=smem, size = 0x4, offset = 0x4, fixed_abs, tag = 'smem constant byte address 0x4 - core index']
  #allocation1 [shape = 'u32[144,128]{1,0:T(1,128)}', space=vmem, size = 0x12000, scoped, tag = 'internal scratch']
  %s0 = inlined_call_operand.vmem [shape: f32[2,64,36], index: 0, kind: input, shape index: {}]
  %s1 = inlined_call_operand.vmem [shape: bf16[5,36,64], index: 1, kind: input, shape index: {}]
  %s2 = inlined_call_operand.vmem [shape: f32[1,64], index: 2, kind: input, shape index: {}]
  %s3 = inlined_call_operand.vmem [shape: bf16[3,64,64], index: 3, kind: input, shape index: {}]
  %s4 = inlined_call_operand.vmem [shape: f32[1,64], index: 4, kind: input, shape index: {}]
  %s5 = inlined_call_operand.vmem [shape: bf16[3,64,128], index: 5, kind: input, shape index: {}]
  %s6 = inlined_call_operand.vmem [shape: f32[1,128], index: 6, kind: input, shape index: {}]
  %s7 = inlined_call_operand.vmem [shape: bf16[3,128,64], index: 7, kind: input, shape index: {}]
  %s8 = inlined_call_operand.vmem [shape: f32[1,64], index: 8, kind: input, shape index: {}]
  %s9 = inlined_call_operand.vmem [shape: f32[2,1,160], index: 9, kind: output, shape index: {}]
  %s10 = sld [smem:[#allocation0]]
  $region69: #{my_cnn_model_forward.1} parent=0
    _
  %s12 = ssub.s32 1, %s10
  %s13 = scalar_select 0, %s12, %s10
  loop: start=0, step=1, limit=4
  $region2: #{my_cnn_model_forward.1} parent=0 // loop_pre_header
    _
  $region3: #{my_cnn_model_forward.1} parent=0 // loop_header
    %s15 = sphi 0, %s19
    %p16 = scmp.ge.s32.totalorder %s15, 4
    %s25 = sphi 0, %s27
    %s28 = sphi 0, %s25
    %s29 = sphi 0, %s28
    %s45 = sphi 0, %s29
    %s49 = sphi 0, %s49
    %s51 = sphi 0, %s49
    %s52 = sphi 0, %s51
    %s66 = sphi 0, %s52
    %s70 = sphi 0, %s70
    %s72 = sphi 0, %s70
    %s73 = sphi 0, %s72
    %s87 = sphi 0, %s73
    %s91 = sphi 0, %s91
    %s93 = sphi 0, %s91
    %s94 = sphi 0, %s93
    %s108 = sphi 0, %s94
    %s112 = sphi 0, %s112
    %s114 = sphi 0, %s112
    %s115 = sphi 0, %s114
    %s129 = sphi 0, %s115
    %s133 = sphi 0, %s133
    %s135 = sphi 0, %s133
    %s136 = sphi 0, %s135
    %s150 = sphi 0, %s136
    %s154 = sphi 0, %s154
    %s156 = sphi 0, %s154
    %s157 = sphi 0, %s156
    %s171 = sphi 0, %s157
    %s175 = sphi 0, %s175
    %s177 = sphi 0, %s175
    %s178 = sphi 0, %s177
    %s192 = sphi 0, %s178
    %s196 = sphi 0, %s196
    %s198 = sphi 0, %s196
    %s199 = sphi 0, %s198
    %s213 = sphi 0, %s199
    %s219 = sphi 0, %s221
    %s222 = sphi 0, %s219
    %s223 = sphi 0, %s222
    %s239 = sphi 0, %s223
  $region4: #{my_cnn_model_forward.1} parent=0 // loop_header_branch
    %18 = sbr.rel (%p16) target = $region8
  $region5: #{my_cnn_model_forward.1} parent=0 // loop_body
    %s20 = ssub.s32 %s15, 1
    %s21 = ssub.s32 %s15, 2
    %s22 = sadd.s32 %s15, 1
    %s23 = ssub.s32 %s15, %s22
    %p24 = scmp.eq.s32.totalorder %s23, 0
    %s26 = sadd.s32 %s25, 1
    %s27 = scalar_select %p24, %s25, %s26
    %p30 = pneg %p24
    %p31 = scmp.eq.s32.totalorder %s15, 1
    %p32 = por %p30, %p31
    %p33 = scmp.ne.s32.totalorder %s25, %s28
    %p34 = scmp.eq.s32.totalorder %s15, 0
    %p35 = por %p33, %p34
    %p36 = scmp.ne.s32.totalorder %s25, %s28
    %p37 = scmp.eq.s32.totalorder %s20, 1
    %p38 = por %p36, %p37
    %p39 = scmp.ne.s32.totalorder %s28, %s29
    %p40 = scmp.eq.s32.totalorder %s20, 0
    %p41 = por %p39, %p40
    %p42 = scmp.ne.s32.totalorder %s28, %s29
    %p43 = scmp.eq.s32.totalorder %s21, 1
    %p44 = por %p42, %p43
    %p46 = scmp.ne.s32.totalorder %s29, %s45
    %p47 = scmp.eq.s32.totalorder %s21, 0
    %p48 = por %p46, %p47
    %s50 = sadd.s32 %s49, 1
    %p53 = scmp.eq.s32.totalorder %s15, 1
    %p54 = scmp.ne.s32.totalorder %s49, %s51
    %p55 = scmp.eq.s32.totalorder %s15, 0
    %p56 = por %p54, %p55
    %p57 = scmp.ne.s32.totalorder %s49, %s51
    %p58 = scmp.eq.s32.totalorder %s20, 1
    %p59 = por %p57, %p58
    %p60 = scmp.ne.s32.totalorder %s51, %s52
    %p61 = scmp.eq.s32.totalorder %s20, 0
    %p62 = por %p60, %p61
    %p63 = scmp.ne.s32.totalorder %s51, %s52
    %p64 = scmp.eq.s32.totalorder %s21, 1
    %p65 = por %p63, %p64
    %p67 = scmp.ne.s32.totalorder %s52, %s66
    %p68 = scmp.eq.s32.totalorder %s21, 0
    %p69 = por %p67, %p68
    %s71 = sadd.s32 %s70, 1
    %p74 = scmp.eq.s32.totalorder %s15, 1
    %p75 = scmp.ne.s32.totalorder %s70, %s72
    %p76 = scmp.eq.s32.totalorder %s15, 0
    %p77 = por %p75, %p76
    %p78 = scmp.ne.s32.totalorder %s70, %s72
    %p79 = scmp.eq.s32.totalorder %s20, 1
    %p80 = por %p78, %p79
    %p81 = scmp.ne.s32.totalorder %s72, %s73
    %p82 = scmp.eq.s32.totalorder %s20, 0
    %p83 = por %p81, %p82
    %p84 = scmp.ne.s32.totalorder %s72, %s73
    %p85 = scmp.eq.s32.totalorder %s21, 1
    %p86 = por %p84, %p85
    %p88 = scmp.ne.s32.totalorder %s73, %s87
    %p89 = scmp.eq.s32.totalorder %s21, 0
    %p90 = por %p88, %p89
    %s92 = sadd.s32 %s91, 1
    %p95 = scmp.eq.s32.totalorder %s15, 1
    %p96 = scmp.ne.s32.totalorder %s91, %s93
    %p97 = scmp.eq.s32.totalorder %s15, 0
    %p98 = por %p96, %p97
    %p99 = scmp.ne.s32.totalorder %s91, %s93
    %p100 = scmp.eq.s32.totalorder %s20, 1
    %p101 = por %p99, %p100
    %p102 = scmp.ne.s32.totalorder %s93, %s94
    %p103 = scmp.eq.s32.totalorder %s20, 0
    %p104 = por %p102, %p103
    %p105 = scmp.ne.s32.totalorder %s93, %s94
    %p106 = scmp.eq.s32.totalorder %s21, 1
    %p107 = por %p105, %p106
    %p109 = scmp.ne.s32.totalorder %s94, %s108
    %p110 = scmp.eq.s32.totalorder %s21, 0
    %p111 = por %p109, %p110
    %s113 = sadd.s32 %s112, 1
    %p116 = scmp.eq.s32.totalorder %s15, 1
    %p117 = scmp.ne.s32.totalorder %s112, %s114
    %p118 = scmp.eq.s32.totalorder %s15, 0
    %p119 = por %p117, %p118
    %p120 = scmp.ne.s32.totalorder %s112, %s114
    %p121 = scmp.eq.s32.totalorder %s20, 1
    %p122 = por %p120, %p121
    %p123 = scmp.ne.s32.totalorder %s114, %s115
    %p124 = scmp.eq.s32.totalorder %s20, 0
    %p125 = por %p123, %p124
    %p126 = scmp.ne.s32.totalorder %s114, %s115
    %p127 = scmp.eq.s32.totalorder %s21, 1
    %p128 = por %p126, %p127
    %p130 = scmp.ne.s32.totalorder %s115, %s129
    %p131 = scmp.eq.s32.totalorder %s21, 0
    %p132 = por %p130, %p131
    %s134 = sadd.s32 %s133, 1
    %p137 = scmp.eq.s32.totalorder %s15, 1
    %p138 = scmp.ne.s32.totalorder %s133, %s135
    %p139 = scmp.eq.s32.totalorder %s15, 0
    %p140 = por %p138, %p139
    %p141 = scmp.ne.s32.totalorder %s133, %s135
    %p142 = scmp.eq.s32.totalorder %s20, 1
    %p143 = por %p141, %p142
    %p144 = scmp.ne.s32.totalorder %s135, %s136
    %p145 = scmp.eq.s32.totalorder %s20, 0
    %p146 = por %p144, %p145
    %p147 = scmp.ne.s32.totalorder %s135, %s136
    %p148 = scmp.eq.s32.totalorder %s21, 1
    %p149 = por %p147, %p148
    %p151 = scmp.ne.s32.totalorder %s136, %s150
    %p152 = scmp.eq.s32.totalorder %s21, 0
    %p153 = por %p151, %p152
    %s155 = sadd.s32 %s154, 1
    %p158 = scmp.eq.s32.totalorder %s15, 1
    %p159 = scmp.ne.s32.totalorder %s154, %s156
    %p160 = scmp.eq.s32.totalorder %s15, 0
    %p161 = por %p159, %p160
    %p162 = scmp.ne.s32.totalorder %s154, %s156
    %p163 = scmp.eq.s32.totalorder %s20, 1
    %p164 = por %p162, %p163
    %p165 = scmp.ne.s32.totalorder %s156, %s157
    %p166 = scmp.eq.s32.totalorder %s20, 0
    %p167 = por %p165, %p166
    %p168 = scmp.ne.s32.totalorder %s156, %s157
    %p169 = scmp.eq.s32.totalorder %s21, 1
    %p170 = por %p168, %p169
    %p172 = scmp.ne.s32.totalorder %s157, %s171
    %p173 = scmp.eq.s32.totalorder %s21, 0
    %p174 = por %p172, %p173
    %s176 = sadd.s32 %s175, 1
    %p179 = scmp.eq.s32.totalorder %s15, 1
    %p180 = scmp.ne.s32.totalorder %s175, %s177
    %p181 = scmp.eq.s32.totalorder %s15, 0
    %p182 = por %p180, %p181
    %p183 = scmp.ne.s32.totalorder %s175, %s177
    %p184 = scmp.eq.s32.totalorder %s20, 1
    %p185 = por %p183, %p184
    %p186 = scmp.ne.s32.totalorder %s177, %s178
    %p187 = scmp.eq.s32.totalorder %s20, 0
    %p188 = por %p186, %p187
    %p189 = scmp.ne.s32.totalorder %s177, %s178
    %p190 = scmp.eq.s32.totalorder %s21, 1
    %p191 = por %p189, %p190
    %p193 = scmp.ne.s32.totalorder %s178, %s192
    %p194 = scmp.eq.s32.totalorder %s21, 0
    %p195 = por %p193, %p194
    %s197 = sadd.s32 %s196, 1
    %p200 = scmp.eq.s32.totalorder %s15, 1
    %p201 = scmp.ne.s32.totalorder %s196, %s198
    %p202 = scmp.eq.s32.totalorder %s15, 0
    %p203 = por %p201, %p202
    %p204 = scmp.ne.s32.totalorder %s196, %s198
    %p205 = scmp.eq.s32.totalorder %s20, 1
    %p206 = por %p204, %p205
    %p207 = scmp.ne.s32.totalorder %s198, %s199
    %p208 = scmp.eq.s32.totalorder %s20, 0
    %p209 = por %p207, %p208
    %p210 = scmp.ne.s32.totalorder %s198, %s199
    %p211 = scmp.eq.s32.totalorder %s21, 1
    %p212 = por %p210, %p211
    %p214 = scmp.ne.s32.totalorder %s199, %s213
    %p215 = scmp.eq.s32.totalorder %s21, 0
    %p216 = por %p214, %p215
    %s217 = ssub.s32 %s15, %s22
    %p218 = scmp.eq.s32.totalorder %s217, 0
    %s220 = sadd.s32 %s219, 1
    %s221 = scalar_select %p218, %s219, %s220
    %p224 = pneg %p218
    %p225 = scmp.eq.s32.totalorder %s15, 1
    %p226 = por %p224, %p225
    %p227 = scmp.ne.s32.totalorder %s219, %s222
    %p228 = scmp.eq.s32.totalorder %s15, 0
    %p229 = por %p227, %p228
    %p230 = scmp.ne.s32.totalorder %s219, %s222
    %p231 = scmp.eq.s32.totalorder %s20, 1
    %p232 = por %p230, %p231
    %p233 = scmp.ne.s32.totalorder %s222, %s223
    %p234 = scmp.eq.s32.totalorder %s20, 0
    %p235 = por %p233, %p234
    %p236 = scmp.ne.s32.totalorder %s222, %s223
    %p237 = scmp.eq.s32.totalorder %s21, 1
    %p238 = por %p236, %p237
    %p240 = scmp.ne.s32.totalorder %s223, %s239
    %p241 = scmp.eq.s32.totalorder %s21, 0
    %p242 = por %p240, %p241
    %p243 = scmp.le.s32.totalorder 1, %s15
    %p244 = scmp.lt.s32.totalorder %s15, 3
    %p245 = pnand %p243, %p244
    %p246 = pneg %p245
    // Predicated region
    $region9: #{my_cnn_model_forward.1} parent=5 // pred_check
      _
    $region10: #{my_cnn_model_forward.1} parent=5 // pred_check_branch
      %248 = sbr.rel (%p245) target = $region12
    $region11: #{my_cnn_model_forward.1} parent=5 // pred_region
      %s249 = ssub.s32 %s15, 1
      // Predicated region
      $region13: #{my_cnn_model_forward.1} parent=11 // pred_check
        %p250 = pneg %p62
      $region14: #{my_cnn_model_forward.1} parent=11 // pred_check_branch
        %252 = sbr.rel (%p250) target = $region16
      $region15: #{my_cnn_model_forward.1} parent=11 // pred_region
        _
      $region16: #{my_cnn_model_forward.1} parent=11 // pred_fallthru
        _
      // Predicated region
      $region17: #{my_cnn_model_forward.1} parent=11 // pred_check
        %p253 = pneg %p83
      $region18: #{my_cnn_model_forward.1} parent=11 // pred_check_branch
        %255 = sbr.rel (%p253) target = $region20
      $region19: #{my_cnn_model_forward.1} parent=11 // pred_region
        _
      $region20: #{my_cnn_model_forward.1} parent=11 // pred_fallthru
        _
      // Predicated region
      $region21: #{my_cnn_model_forward.1} parent=11 // pred_check
        %p256 = pneg %p104
      $region22: #{my_cnn_model_forward.1} parent=11 // pred_check_branch
        %258 = sbr.rel (%p256) target = $region24
      $region23: #{my_cnn_model_forward.1} parent=11 // pred_region
        _
      $region24: #{my_cnn_model_forward.1} parent=11 // pred_fallthru
        _
      // Predicated region
      $region25: #{my_cnn_model_forward.1} parent=11 // pred_check
        %p259 = pneg %p125
      $region26: #{my_cnn_model_forward.1} parent=11 // pred_check_branch
        %261 = sbr.rel (%p259) target = $region28
      $region27: #{my_cnn_model_forward.1} parent=11 // pred_region
        _
      $region28: #{my_cnn_model_forward.1} parent=11 // pred_fallthru
        _
      // Predicated region
      $region29: #{my_cnn_model_forward.1} parent=11 // pred_check
        %p262 = pneg %p146
      $region30: #{my_cnn_model_forward.1} parent=11 // pred_check_branch
        %264 = sbr.rel (%p262) target = $region32
      $region31: #{my_cnn_model_forward.1} parent=11 // pred_region
        _
      $region32: #{my_cnn_model_forward.1} parent=11 // pred_fallthru
        _
      // Predicated region
      $region33: #{my_cnn_model_forward.1} parent=11 // pred_check
        %p265 = pneg %p167
      $region34: #{my_cnn_model_forward.1} parent=11 // pred_check_branch
        %267 = sbr.rel (%p265) target = $region36
      $region35: #{my_cnn_model_forward.1} parent=11 // pred_region
        _
      $region36: #{my_cnn_model_forward.1} parent=11 // pred_fallthru
        _
      // Predicated region
      $region37: #{my_cnn_model_forward.1} parent=11 // pred_check
        %p268 = pneg %p188
      $region38: #{my_cnn_model_forward.1} parent=11 // pred_check_branch
        %270 = sbr.rel (%p268) target = $region40
      $region39: #{my_cnn_model_forward.1} parent=11 // pred_region
        _
      $region40: #{my_cnn_model_forward.1} parent=11 // pred_fallthru
        _
      // Predicated region
      $region41: #{my_cnn_model_forward.1} parent=11 // pred_check
        %p271 = pneg %p209
      $region42: #{my_cnn_model_forward.1} parent=11 // pred_check_branch
        %273 = sbr.rel (%p271) target = $region44
      $region43: #{my_cnn_model_forward.1} parent=11 // pred_region
        _
      $region44: #{my_cnn_model_forward.1} parent=11 // pred_fallthru
        _
    $region12: #{my_cnn_model_forward.1} parent=5 // pred_fallthru
      _
    %p274 = scmp.lt.s32.totalorder %s15, 2
    // Predicated region
    $region45: #{my_cnn_model_forward.1} parent=5 // pred_check
      %p275 = pneg %p274
    $region46: #{my_cnn_model_forward.1} parent=5 // pred_check_branch
      %277 = sbr.rel (%p275) target = $region48
    $region47: #{my_cnn_model_forward.1} parent=5 // pred_region
      // Predicated region
      $region49: #{my_cnn_model_forward.1} parent=47 // pred_check
        %p278 = pneg %p35
      $region50: #{my_cnn_model_forward.1} parent=47 // pred_check_branch
        %280 = sbr.rel (%p278) target = $region52
      $region51: #{my_cnn_model_forward.1} parent=47 // pred_region
        %p281 = scmp.lt.s32.totalorder %s15, 1
        %s282 = scalar_select %p281, %s15, 1
        %s283 = smul.addr %s282, 8
        %s284 = smul.addr %s283, 8
        %s285 = scalar_lea.vmem %s0, %s284
      $region52: #{my_cnn_model_forward.1} parent=47 // pred_fallthru
        _
    $region48: #{my_cnn_model_forward.1} parent=5 // pred_fallthru
      _
    %p286 = scmp.le.s32.totalorder 1, %s15
    %p287 = scmp.lt.s32.totalorder %s15, 3
    %p288 = pnand %p286, %p287
    %p289 = pneg %p288
    // Predicated region
    $region53: #{my_cnn_model_forward.1} parent=5 // pred_check
      _
    $region54: #{my_cnn_model_forward.1} parent=5 // pred_check_branch
      %291 = sbr.rel (%p288) target = $region56
    $region55: #{my_cnn_model_forward.1} parent=5 // pred_region
      %s292 = ssub.s32 %s15, 1
      %p293 = scmp.lt.s32.totalorder %s20, 1
      %s294 = scalar_select %p293, %s20, 1
      %s295 = smul.addr %s294, 8
      %s296 = smul.addr %s295, 8
      %s297 = scalar_lea.vmem %s0, %s296
      %p298 = pneg %p41
      %p299 = pneg %p38
      %p300 = pneg %p62
      %p301 = pneg %p59
      %p302 = pneg %p83
      %p303 = pneg %p80
      %p304 = pneg %p104
      %p305 = pneg %p101
      %p306 = pneg %p125
      %p307 = pneg %p122
      %p308 = pneg %p146
      %p309 = pneg %p143
      %p310 = pneg %p167
      %p311 = pneg %p164
      %p312 = pneg %p188
      %p313 = pneg %p185
      %p314 = pneg %p209
      %p315 = pneg %p206
      %p316 = pneg %p235
      %p317 = pneg %p232
      %p318 = scmp.lt.s32.totalorder %s20, 1
      %s319 = scalar_select %p318, %s20, 1
      %s320 = smul.addr %s319, 2
      %s321 = scalar_lea.vmem %s9, %s320
      %p322 = scmp.lt.s32.totalorder %s20, 1
      %s323 = scalar_select %p322, %s20, 1
      %s324 = smul.addr %s323, 8
      %s325 = smul.addr %s324, 8
      %s326 = scalar_lea.vmem %s0, %s325
      %p327 = scmp.lt.s32.totalorder %s20, 1
      %s328 = scalar_select %p327, %s20, 1
      %s329 = smul.addr %s328, 2
      %s330 = scalar_lea.vmem %s9, %s329
      %v332 = vld [vmem:[%s326] sm:$0xff]
      %v333 = vld [vmem:[%s326 + $0x8] sm:$0xff]
      %v334 = vld [vmem:[%s326 + $0x10] sm:$0xff]
      %v335 = vld [vmem:[%s326 + $0x18] sm:$0xff]
      %v336 = vld [vmem:[%s326 + $0x20] sm:$0xff]
      %v337 = vld [vmem:[%s326 + $0x28] sm:$0xff]
      %v338 = vld [vmem:[%s326 + $0x30] sm:$0xff]
      %v339 = vld [vmem:[%s326 + $0x38] sm:$0xff]
      %v340 = vpack.c.bf16 %v333, %v332
      %v341 = vpack.c.bf16 %v335, %v334
      %v342 = vpack.c.bf16 %v337, %v336
      %v343 = vpack.c.bf16 %v339, %v338
      %v344 = vld [vmem:[%s1] sm:$0xf]
      %v345 = vld [vmem:[%s1 + $0x4] sm:$0xf]
      %v346 = vld [vmem:[%s1 + $0x8] sm:$0xf]
      %v347 = vld [vmem:[%s1 + $0xc] sm:$0xf]
      %v348 = vld [vmem:[%s1 + $0x10] sm:$0x3]
      %v349 = vrot.slane %v332, 1
      %v350 = vrot.slane %v333, 1
      %v351 = vrot.slane %v334, 1
      %v352 = vrot.slane %v335, 1
      %v353 = vrot.slane %v336, 1
      %v354 = vrot.slane %v337, 1
      %v355 = vrot.slane %v338, 1
      %v356 = vrot.slane %v339, 1
      %v357 = vlaneseq
      %v358 = vshrl.u32 %v357, 7
      %vm359 = vcmp.lt.s32.totalorder %v358, 7
      %v360 = vsel %vm359, %v355, %v356
      %v361 = vsel %vm359, %v354, %v355
      %v362 = vsel %vm359, %v353, %v354
      %v363 = vsel %vm359, %v352, %v353
      %v364 = vsel %vm359, %v351, %v352
      %v365 = vsel %vm359, %v350, %v351
      %v366 = vsel %vm359, %v349, %v350
      %v367 = vsel %vm359, %v356, %v349
      %v368 = vpack.c.bf16 %v365, %v366
      %v369 = vpack.c.bf16 %v363, %v364
      %v370 = vpack.c.bf16 %v361, %v362
      %v371 = vpack.c.bf16 %v367, %v360
      %s372 = scalar_lea.vmem %s1, 20
      %v373 = vld [vmem:[%s372] sm:$0xf]
      %v374 = vld [vmem:[%s372 + $0x4] sm:$0xf]
      %v375 = vld [vmem:[%s372 + $0x8] sm:$0xf]
      %v376 = vld [vmem:[%s372 + $0xc] sm:$0xf]
      %v377 = vld [vmem:[%s372 + $0x10] sm:$0x3]
      %v383 = vunpack.c.l.b16 %v373
      %v384 = vunpack.c.l.b16 %v374
      %v385 = vunpack.c.l.b16 %v375
      %v386 = vunpack.c.l.b16 %v376
      %v387 = vunpack.c.l.b16 %v377
      %v388 = vpack.c.b16 %v384, %v383
      %v389 = vpack.c.b16 %v386, %v385
      %v390 = vpack.c.b16 %v387, %v387
      %vm393 = vcmask 293888
      %v395 = vsel %vm393, %v368, 0
      %v398 = vsel %vm393, %v369, 0
      %v401 = vsel %vm393, %v370, 0
      %v404 = vsel %vm393, %v371, 0
      %vm406 = vcmask 1041408
      %v408 = vsel %vm406, %v390, 0
      %410 = vmatprep.subr.bf16.mxu0 0
      %411 = vmatpush1.bf16.msra.mxu0 %v388
      %412 = vmatprep.subr.bf16.mxu0 0
      %413 = vmatpush1.bf16.msra.mxu0 %v389
      %414 = vmatprep.subr.bf16.mxu0 0
      %415 = vmatpush1.bf16.msra.mxu0 %v408
      %416 = vmatprep.subr.bf16.mxu0 0
      %417 = vmatpush1.bf16.msra.mxu0 0
      %418 = vmatprep.subr.bf16.mxu0 0
      %419 = vmatpush1.bf16.msra.mxu0 0
      %420 = vmatprep.subr.bf16.mxu0 0
      %421 = vmatpush1.bf16.msra.mxu0 0
      %422 = vmatprep.subr.bf16.mxu0 0
      %423 = vmatpush1.bf16.msra.mxu0 0
      %424 = vmatprep.subr.bf16.mxu0 0
      %425 = vmatpush1.bf16.msra.mxu0 0
      %426 = vmatprep.subr.bf16.mxu0 0
      %427 = vmatpush1.bf16.msra.mxu0 0
      %428 = vmatprep.subr.bf16.mxu0 0
      %429 = vmatpush1.bf16.msra.mxu0 0
      %430 = vmatprep.subr.bf16.mxu0 0
      %431 = vmatpush1.bf16.msra.mxu0 0
      %432 = vmatprep.subr.bf16.mxu0 0
      %433 = vmatpush1.bf16.msra.mxu0 0
      %434 = vmatprep.subr.bf16.mxu0 0
      %435 = vmatpush1.bf16.msra.mxu0 0
      %436 = vmatprep.subr.bf16.mxu0 0
      %437 = vmatpush1.bf16.msra.mxu0 0
      %438 = vmatprep.subr.bf16.mxu0 0
      %439 = vmatpush1.bf16.msra.mxu0 0
      %440 = vmatprep.subr.bf16.mxu0 0
      %441 = vmatpush1.bf16.msra.mxu0 0
      %442 = vmatprep.mubr.bf16.mxu0 0
      %443 = vmatmul.mubr.bf16.gmra.mrb[0].mxu0 %v395
      %v444 = vpop.f32.mrb[0].mxu0
      %v445 = vadd.f32 0.0, %v444
      %v446 = vpop.f32.mrb[0].mxu0
      %v447 = vpop.f32.mrb[0].mxu0
      %v448 = vadd.f32 0.0, %v447
      %v449 = vpop.f32.mrb[0].mxu0
      %450 = vmatprep.mubr.bf16.mxu0 0
      %451 = vmatmul.mubr.bf16.gmra.mrb[0].mxu0 %v398
      %v452 = vpop.f32.mrb[0].mxu0
      %v453 = vadd.f32 0.0, %v452
      %v454 = vpop.f32.mrb[0].mxu0
      %v455 = vpop.f32.mrb[0].mxu0
      %v456 = vadd.f32 0.0, %v455
      %v457 = vpop.f32.mrb[0].mxu0
      %458 = vmatprep.mubr.bf16.mxu0 0
      %459 = vmatmul.mubr.bf16.gmra.mrb[0].mxu0 %v401
      %v460 = vpop.f32.mrb[0].mxu0
      %v461 = vadd.f32 0.0, %v460
      %v462 = vpop.f32.mrb[0].mxu0
      %v463 = vpop.f32.mrb[0].mxu0
      %v464 = vadd.f32 0.0, %v463
      %v465 = vpop.f32.mrb[0].mxu0
      %466 = vmatprep.mubr.bf16.mxu0 0
      %467 = vmatmul.mubr.bf16.gmra.mrb[0].mxu0 %v404
      %v468 = vpop.f32.mrb[0].mxu0
      %v469 = vadd.f32 0.0, %v468
      %v470 = vpop.f32.mrb[0].mxu0
      %v471 = vpop.f32.mrb[0].mxu0
      %v472 = vadd.f32 0.0, %v471
      %v473 = vpop.f32.mrb[0].mxu0
      %474 = vdwg.mxu0
      %v480 = vunpack.c.l.b16 %v344
      %v481 = vunpack.c.l.b16 %v345
      %v482 = vunpack.c.l.b16 %v346
      %v483 = vunpack.c.l.b16 %v347
      %v484 = vunpack.c.l.b16 %v348
      %v485 = vpack.c.b16 %v481, %v480
      %v486 = vpack.c.b16 %v483, %v482
      %v487 = vpack.c.b16 %v484, %v484
      %v491 = vsel %vm393, %v340, 0
      %v494 = vsel %vm393, %v341, 0
      %v497 = vsel %vm393, %v342, 0
      %v500 = vsel %vm393, %v343, 0
      %v503 = vsel %vm406, %v487, 0
      %505 = vmatprep.subr.bf16.mxu0 0
      %506 = vmatpush1.bf16.msra.mxu0 %v485
      %507 = vmatprep.subr.bf16.mxu0 0
      %508 = vmatpush1.bf16.msra.mxu0 %v486
      %509 = vmatprep.subr.bf16.mxu0 0
      %510 = vmatpush1.bf16.msra.mxu0 %v503
      %511 = vmatprep.subr.bf16.mxu0 0
      %512 = vmatpush1.bf16.msra.mxu0 0
      %513 = vmatprep.subr.bf16.mxu0 0
      %514 = vmatpush1.bf16.msra.mxu0 0
      %515 = vmatprep.subr.bf16.mxu0 0
      %516 = vmatpush1.bf16.msra.mxu0 0
      %517 = vmatprep.subr.bf16.mxu0 0
      %518 = vmatpush1.bf16.msra.mxu0 0
      %519 = vmatprep.subr.bf16.mxu0 0
      %520 = vmatpush1.bf16.msra.mxu0 0
      %521 = vmatprep.subr.bf16.mxu0 0
      %522 = vmatpush1.bf16.msra.mxu0 0
      %523 = vmatprep.subr.bf16.mxu0 0
      %524 = vmatpush1.bf16.msra.mxu0 0
      %525 = vmatprep.subr.bf16.mxu0 0
      %526 = vmatpush1.bf16.msra.mxu0 0
      %527 = vmatprep.subr.bf16.mxu0 0
      %528 = vmatpush1.bf16.msra.mxu0 0
      %529 = vmatprep.subr.bf16.mxu0 0
      %530 = vmatpush1.bf16.msra.mxu0 0
      %531 = vmatprep.subr.bf16.mxu0 0
      %532 = vmatpush1.bf16.msra.mxu0 0
      %533 = vmatprep.subr.bf16.mxu0 0
      %534 = vmatpush1.bf16.msra.mxu0 0
      %535 = vmatprep.subr.bf16.mxu0 0
      %536 = vmatpush1.bf16.msra.mxu0 0
      %537 = vmatprep.mubr.bf16.mxu0 0
      %538 = vmatmul.mubr.bf16.gmra.mrb[0].mxu0 %v491
      %v539 = vpop.f32.mrb[0].mxu0
      %v540 = vadd.f32 %v445, %v539
      %v541 = vpop.f32.mrb[0].mxu0
      %v542 = vpop.f32.mrb[0].mxu0
      %v543 = vadd.f32 %v448, %v542
      %v544 = vpop.f32.mrb[0].mxu0
      %545 = vmatprep.mubr.bf16.mxu0 0
      %546 = vmatmul.mubr.bf16.gmra.mrb[0].mxu0 %v494
      %v547 = vpop.f32.mrb[0].mxu0
      %v548 = vadd.f32 %v453, %v547
      %v549 = vpop.f32.mrb[0].mxu0
      %v550 = vpop.f32.mrb[0].mxu0
      %v551 = vadd.f32 %v456, %v550
      %v552 = vpop.f32.mrb[0].mxu0
      %553 = vmatprep.mubr.bf16.mxu0 0
      %554 = vmatmul.mubr.bf16.gmra.mrb[0].mxu0 %v497
      %v555 = vpop.f32.mrb[0].mxu0
      %v556 = vadd.f32 %v461, %v555
      %v557 = vpop.f32.mrb[0].mxu0
      %v558 = vpop.f32.mrb[0].mxu0
      %v559 = vadd.f32 %v464, %v558
      %v560 = vpop.f32.mrb[0].mxu0
      %561 = vmatprep.mubr.bf16.mxu0 0
      %562 = vmatmul.mubr.bf16.gmra.mrb[0].mxu0 %v500
      %v563 = vpop.f32.mrb[0].mxu0
      %v564 = vadd.f32 %v469, %v563
      %v565 = vpop.f32.mrb[0].mxu0
      %v566 = vpop.f32.mrb[0].mxu0
      %v567 = vadd.f32 %v472, %v566
      %v568 = vpop.f32.mrb[0].mxu0
      %569 = vdwg.mxu0
      %v570 = vrot.slane %v332, 2
      %v571 = vrot.slane %v333, 2
      %v572 = vrot.slane %v334, 2
      %v573 = vrot.slane %v335, 2
      %v574 = vrot.slane %v336, 2
      %v575 = vrot.slane %v337, 2
      %v576 = vrot.slane %v338, 2
      %v577 = vrot.slane %v339, 2
      %vm578 = vcmp.lt.s32.totalorder %v358, 6
      %v579 = vsel %vm578, %v576, %v577
      %v580 = vsel %vm578, %v575, %v576
      %v581 = vsel %vm578, %v574, %v575
      %v582 = vsel %vm578, %v573, %v574
      %v583 = vsel %vm578, %v572, %v573
      %v584 = vsel %vm578, %v571, %v572
      %v585 = vsel %vm578, %v570, %v571
      %v586 = vsel %vm578, %v577, %v570
      %v587 = vpack.c.bf16 %v584, %v585
      %v588 = vpack.c.bf16 %v582, %v583
      %v589 = vpack.c.bf16 %v580, %v581
      %v590 = vpack.c.bf16 %v586, %v579
      %s591 = scalar_lea.vmem %s1, 40
      %v592 = vld [vmem:[%s591] sm:$0xf]
      %v593 = vld [vmem:[%s591 + $0x4] sm:$0xf]
      %v594 = vld [vmem:[%s591 + $0x8] sm:$0xf]
      %v595 = vld [vmem:[%s591 + $0xc] sm:$0xf]
      %v596 = vld [vmem:[%s591 + $0x10] sm:$0x3]
      %v602 = vunpack.c.l.b16 %v592
      %v603 = vunpack.c.l.b16 %v593
      %v604 = vunpack.c.l.b16 %v594
      %v605 = vunpack.c.l.b16 %v595
      %v606 = vunpack.c.l.b16 %v596
      %v607 = vpack.c.b16 %v603, %v602
      %v608 = vpack.c.b16 %v605, %v604
      %v609 = vpack.c.b16 %v606, %v606
      %v613 = vsel %vm393, %v587, 0
      %v616 = vsel %vm393, %v588, 0
      %v619 = vsel %vm393, %v589, 0
      %v622 = vsel %vm393, %v590, 0
      %v625 = vsel %vm406, %v609, 0
      %627 = vmatprep.subr.bf16.mxu0 0
      %628 = vmatpush1.bf16.msra.mxu0 %v607
      %629 = vmatprep.subr.bf16.mxu0 0
      %630 = vmatpush1.bf16.msra.mxu0 %v608
      %631 = vmatprep.subr.bf16.mxu0 0
      %632 = vmatpush1.bf16.msra.mxu0 %v625
      %633 = vmatprep.subr.bf16.mxu0 0
      %634 = vmatpush1.bf16.msra.mxu0 0
      %635 = vmatprep.subr.bf16.mxu0 0
      %636 = vmatpush1.bf16.msra.mxu0 0
      %637 = vmatprep.subr.bf16.mxu0 0
      %638 = vmatpush1.bf16.msra.mxu0 0
      %639 = vmatprep.subr.bf16.mxu0 0
      %640 = vmatpush1.bf16.msra.mxu0 0
      %641 = vmatprep.subr.bf16.mxu0 0
      %642 = vmatpush1.bf16.msra.mxu0 0
      %643 = vmatprep.subr.bf16.mxu0 0
      %644 = vmatpush1.bf16.msra.mxu0 0
      %645 = vmatprep.subr.bf16.mxu0 0
      %646 = vmatpush1.bf16.msra.mxu0 0
      %647 = vmatprep.subr.bf16.mxu0 0
      %648 = vmatpush1.bf16.msra.mxu0 0
      %649 = vmatprep.subr.bf16.mxu0 0
      %650 = vmatpush1.bf16.msra.mxu0 0
      %651 = vmatprep.subr.bf16.mxu0 0
      %652 = vmatpush1.bf16.msra.mxu0 0
      %653 = vmatprep.subr.bf16.mxu0 0
      %654 = vmatpush1.bf16.msra.mxu0 0
      %655 = vmatprep.subr.bf16.mxu0 0
      %656 = vmatpush1.bf16.msra.mxu0 0
      %657 = vmatprep.subr.bf16.mxu0 0
      %658 = vmatpush1.bf16.msra.mxu0 0
      %659 = vmatprep.mubr.bf16.mxu0 0
      %660 = vmatmul.mubr.bf16.gmra.mrb[0].mxu0 %v613
      %v661 = vpop.f32.mrb[0].mxu0
      %v662 = vadd.f32 0.0, %v661
      %v663 = vpop.f32.mrb[0].mxu0
      %v664 = vpop.f32.mrb[0].mxu0
      %v665 = vadd.f32 0.0, %v664
      %v666 = vpop.f32.mrb[0].mxu0
      %667 = vmatprep.mubr.bf16.mxu0 0
      %668 = vmatmul.mubr.bf16.gmra.mrb[0].mxu0 %v616
      %v669 = vpop.f32.mrb[0].mxu0
      %v670 = vadd.f32 0.0, %v669
      %v671 = vpop.f32.mrb[0].mxu0
      %v672 = vpop.f32.mrb[0].mxu0
      %v673 = vadd.f32 0.0, %v672
      %v674 = vpop.f32.mrb[0].mxu0
      %675 = vmatprep.mubr.bf16.mxu0 0
      %676 = vmatmul.mubr.bf16.gmra.mrb[0].mxu0 %v619
      %v677 = vpop.f32.mrb[0].mxu0
      %v678 = vadd.f32 0.0, %v677
      %v679 = vpop.f32.mrb[0].mxu0
      %v680 = vpop.f32.mrb[0].mxu0
      %v681 = vadd.f32 0.0, %v680
      %v682 = vpop.f32.mrb[0].mxu0
      %683 = vmatprep.mubr.bf16.mxu0 0
      %684 = vmatmul.mubr.bf16.gmra.mrb[0].mxu0 %v622
      %v685 = vpop.f32.mrb[0].mxu0
      %v686 = vadd.f32 0.0, %v685
      %v687 = vpop.f32.mrb[0].mxu0
      %v688 = vpop.f32.mrb[0].mxu0
      %v689 = vadd.f32 0.0, %v688
      %v690 = vpop.f32.mrb[0].mxu0
      %691 = vdwg.mxu0
      %v692 = vadd.f32 %v540, %v662
      %v693 = vadd.f32 %v543, %v665
      %v694 = vadd.f32 %v548, %v670
      %v695 = vadd.f32 %v551, %v673
      %v696 = vadd.f32 %v556, %v678
      %v697 = vadd.f32 %v559, %v681
      %v698 = vadd.f32 %v564, %v686
      %v699 = vadd.f32 %v567, %v689
      %v700 = vrot.slane %v332, 3
      %v701 = vrot.slane %v333, 3
      %v702 = vrot.slane %v334, 3
      %v703 = vrot.slane %v335, 3
      %v704 = vrot.slane %v336, 3
      %v705 = vrot.slane %v337, 3
      %v706 = vrot.slane %v338, 3
      %v707 = vrot.slane %v339, 3
      %vm708 = vcmp.lt.s32.totalorder %v358, 5
      %v709 = vsel %vm708, %v706, %v707
      %v710 = vsel %vm708, %v705, %v706
      %v711 = vsel %vm708, %v704, %v705
      %v712 = vsel %vm708, %v703, %v704
      %v713 = vsel %vm708, %v702, %v703
      %v714 = vsel %vm708, %v701, %v702
      %v715 = vsel %vm708, %v700, %v701
      %v716 = vsel %vm708, %v707, %v700
      %v717 = vpack.c.bf16 %v714, %v715
      %v718 = vpack.c.bf16 %v712, %v713
      %v719 = vpack.c.bf16 %v710, %v711
      %v720 = vpack.c.bf16 %v716, %v709
      %s721 = scalar_lea.vmem %s1, 60
      %v722 = vld [vmem:[%s721] sm:$0xf]
      %v723 = vld [vmem:[%s721 + $0x4] sm:$0xf]
      %v724 = vld [vmem:[%s721 + $0x8] sm:$0xf]
      %v725 = vld [vmem:[%s721 + $0xc] sm:$0xf]
      %v726 = vld [vmem:[%s721 + $0x10] sm:$0x3]
      %v732 = vunpack.c.l.b16 %v722
      %v733 = vunpack.c.l.b16 %v723
      %v734 = vunpack.c.l.b16 %v724
      %v735 = vunpack.c.l.b16 %v725
      %v736 = vunpack.c.l.b16 %v726
      %v737 = vpack.c.b16 %v733, %v732
      %v738 = vpack.c.b16 %v735, %v734
      %v739 = vpack.c.b16 %v736, %v736
      %v743 = vsel %vm393, %v717, 0
      %v746 = vsel %vm393, %v718, 0
      %v749 = vsel %vm393, %v719, 0
      %v752 = vsel %vm393, %v720, 0
      %v755 = vsel %vm406, %v739, 0
      %757 = vmatprep.subr.bf16.mxu0 0
      %758 = vmatpush1.bf16.msra.mxu0 %v737
      %759 = vmatprep.subr.bf16.mxu0 0
      %760 = vmatpush1.bf16.msra.mxu0 %v738
      %761 = vmatprep.subr.bf16.mxu0 0
      %762 = vmatpush1.bf16.msra.mxu0 %v755
      %763 = vmatprep.subr.bf16.mxu0 0
      %764 = vmatpush1.bf16.msra.mxu0 0
      %765 = vmatprep.subr.bf16.mxu0 0
      %766 = vmatpush1.bf16.msra.mxu0 0
      %767 = vmatprep.subr.bf16.mxu0 0
      %768 = vmatpush1.bf16.msra.mxu0 0
      %769 = vmatprep.subr.bf16.mxu0 0
      %770 = vmatpush1.bf16.msra.mxu0 0
      %771 = vmatprep.subr.bf16.mxu0 0
      %772 = vmatpush1.bf16.msra.mxu0 0
      %773 = vmatprep.subr.bf16.mxu0 0
      %774 = vmatpush1.bf16.msra.mxu0 0
      %775 = vmatprep.subr.bf16.mxu0 0
      %776 = vmatpush1.bf16.msra.mxu0 0
      %777 = vmatprep.subr.bf16.mxu0 0
      %778 = vmatpush1.bf16.msra.mxu0 0
      %779 = vmatprep.subr.bf16.mxu0 0
      %780 = vmatpush1.bf16.msra.mxu0 0
      %781 = vmatprep.subr.bf16.mxu0 0
      %782 = vmatpush1.bf16.msra.mxu0 0
      %783 = vmatprep.subr.bf16.mxu0 0
      %784 = vmatpush1.bf16.msra.mxu0 0
      %785 = vmatprep.subr.bf16.mxu0 0
      %786 = vmatpush1.bf16.msra.mxu0 0
      %787 = vmatprep.subr.bf16.mxu0 0
      %788 = vmatpush1.bf16.msra.mxu0 0
      %789 = vmatprep.mubr.bf16.mxu0 0
      %790 = vmatmul.mubr.bf16.gmra.mrb[0].mxu0 %v743
      %v791 = vpop.f32.mrb[0].mxu0
      %v792 = vadd.f32 0.0, %v791
      %v793 = vpop.f32.mrb[0].mxu0
      %v794 = vpop.f32.mrb[0].mxu0
      %v795 = vadd.f32 0.0, %v794
      %v796 = vpop.f32.mrb[0].mxu0
      %797 = vmatprep.mubr.bf16.mxu0 0
      %798 = vmatmul.mubr.bf16.gmra.mrb[0].mxu0 %v746
      %v799 = vpop.f32.mrb[0].mxu0
      %v800 = vadd.f32 0.0, %v799
      %v801 = vpop.f32.mrb[0].mxu0
      %v802 = vpop.f32.mrb[0].mxu0
      %v803 = vadd.f32 0.0, %v802
      %v804 = vpop.f32.mrb[0].mxu0
      %805 = vmatprep.mubr.bf16.mxu0 0
      %806 = vmatmul.mubr.bf16.gmra.mrb[0].mxu0 %v749
      %v807 = vpop.f32.mrb[0].mxu0
      %v808 = vadd.f32 0.0, %v807
      %v809 = vpop.f32.mrb[0].mxu0
      %v810 = vpop.f32.mrb[0].mxu0
      %v811 = vadd.f32 0.0, %v810
      %v812 = vpop.f32.mrb[0].mxu0
      %813 = vmatprep.mubr.bf16.mxu0 0
      %814 = vmatmul.mubr.bf16.gmra.mrb[0].mxu0 %v752
      %v815 = vpop.f32.mrb[0].mxu0
      %v816 = vadd.f32 0.0, %v815
      %v817 = vpop.f32.mrb[0].mxu0
      %v818 = vpop.f32.mrb[0].mxu0
      %v819 = vadd.f32 0.0, %v818
      %v820 = vpop.f32.mrb[0].mxu0
      %821 = vdwg.mxu0
      %v822 = vadd.f32 %v692, %v792
      %v823 = vadd.f32 %v693, %v795
      %v824 = vadd.f32 %v694, %v800
      %v825 = vadd.f32 %v695, %v803
      %v826 = vadd.f32 %v696, %v808
      %v827 = vadd.f32 %v697, %v811
      %v828 = vadd.f32 %v698, %v816
      %v829 = vadd.f32 %v699, %v819
      %v830 = vrot.slane %v332, 4
      %v831 = vrot.slane %v333, 4
      %v832 = vrot.slane %v334, 4
      %v833 = vrot.slane %v335, 4
      %v834 = vrot.slane %v336, 4
      %v835 = vrot.slane %v337, 4
      %v836 = vrot.slane %v338, 4
      %v837 = vrot.slane %v339, 4
      %vm838 = vcmp.lt.s32.totalorder %v358, 4
      %v839 = vsel %vm838, %v836, %v837
      %v840 = vsel %vm838, %v835, %v836
      %v841 = vsel %vm838, %v834, %v835
      %v842 = vsel %vm838, %v833, %v834
      %v843 = vsel %vm838, %v832, %v833
      %v844 = vsel %vm838, %v831, %v832
      %v845 = vsel %vm838, %v830, %v831
      %v846 = vsel %vm838, %v837, %v830
      %v847 = vpack.c.bf16 %v844, %v845
      %v848 = vpack.c.bf16 %v842, %v843
      %v849 = vpack.c.bf16 %v840, %v841
      %v850 = vpack.c.bf16 %v846, %v839
      %s851 = scalar_lea.vmem %s1, 80
      %v852 = vld [vmem:[%s851] sm:$0xf]
      %v853 = vld [vmem:[%s851 + $0x4] sm:$0xf]
      %v854 = vld [vmem:[%s851 + $0x8] sm:$0xf]
      %v855 = vld [vmem:[%s851 + $0xc] sm:$0xf]
      %v856 = vld [vmem:[%s851 + $0x10] sm:$0x3]
      %v862 = vunpack.c.l.b16 %v852
      %v863 = vunpack.c.l.b16 %v853
      %v864 = vunpack.c.l.b16 %v854
      %v865 = vunpack.c.l.b16 %v855
      %v866 = vunpack.c.l.b16 %v856
      %v867 = vpack.c.b16 %v863, %v862
      %v868 = vpack.c.b16 %v865, %v864
      %v869 = vpack.c.b16 %v866, %v866
      %v873 = vsel %vm393, %v847, 0
      %v876 = vsel %vm393, %v848, 0
      %v879 = vsel %vm393, %v849, 0
      %v882 = vsel %vm393, %v850, 0
      %v885 = vsel %vm406, %v869, 0
      %887 = vmatprep.subr.bf16.mxu0 0
      %888 = vmatpush1.bf16.msra.mxu0 %v867
      %889 = vmatprep.subr.bf16.mxu0 0
      %890 = vmatpush1.bf16.msra.mxu0 %v868
      %891 = vmatprep.subr.bf16.mxu0 0
      %892 = vmatpush1.bf16.msra.mxu0 %v885
      %893 = vmatprep.subr.bf16.mxu0 0
      %894 = vmatpush1.bf16.msra.mxu0 0
      %895 = vmatprep.subr.bf16.mxu0 0
      %896 = vmatpush1.bf16.msra.mxu0 0
      %897 = vmatprep.subr.bf16.mxu0 0
      %898 = vmatpush1.bf16.msra.mxu0 0
      %899 = vmatprep.subr.bf16.mxu0 0
      %900 = vmatpush1.bf16.msra.mxu0 0
      %901 = vmatprep.subr.bf16.mxu0 0
      %902 = vmatpush1.bf16.msra.mxu0 0
      %903 = vmatprep.subr.bf16.mxu0 0
      %904 = vmatpush1.bf16.msra.mxu0 0
      %905 = vmatprep.subr.bf16.mxu0 0
      %906 = vmatpush1.bf16.msra.mxu0 0
      %907 = vmatprep.subr.bf16.mxu0 0
      %908 = vmatpush1.bf16.msra.mxu0 0
      %909 = vmatprep.subr.bf16.mxu0 0
      %910 = vmatpush1.bf16.msra.mxu0 0
      %911 = vmatprep.subr.bf16.mxu0 0
      %912 = vmatpush1.bf16.msra.mxu0 0
      %913 = vmatprep.subr.bf16.mxu0 0
      %914 = vmatpush1.bf16.msra.mxu0 0
      %915 = vmatprep.subr.bf16.mxu0 0
      %916 = vmatpush1.bf16.msra.mxu0 0
      %917 = vmatprep.subr.bf16.mxu0 0
      %918 = vmatpush1.bf16.msra.mxu0 0
      %919 = vmatprep.mubr.bf16.mxu0 0
      %920 = vmatmul.mubr.bf16.gmra.mrb[0].mxu0 %v873
      %v921 = vpop.f32.mrb[0].mxu0
      %v922 = vadd.f32 0.0, %v921
      %v923 = vpop.f32.mrb[0].mxu0
      %v924 = vpop.f32.mrb[0].mxu0
      %v925 = vadd.f32 0.0, %v924
      %v926 = vpop.f32.mrb[0].mxu0
      %927 = vmatprep.mubr.bf16.mxu0 0
      %928 = vmatmul.mubr.bf16.gmra.mrb[0].mxu0 %v876
      %v929 = vpop.f32.mrb[0].mxu0
      %v930 = vadd.f32 0.0, %v929
      %v931 = vpop.f32.mrb[0].mxu0
      %v932 = vpop.f32.mrb[0].mxu0
      %v933 = vadd.f32 0.0, %v932
      %v934 = vpop.f32.mrb[0].mxu0
      %935 = vmatprep.mubr.bf16.mxu0 0
      %936 = vmatmul.mubr.bf16.gmra.mrb[0].mxu0 %v879
      %v937 = vpop.f32.mrb[0].mxu0
      %v938 = vadd.f32 0.0, %v937
      %v939 = vpop.f32.mrb[0].mxu0
      %v940 = vpop.f32.mrb[0].mxu0
      %v941 = vadd.f32 0.0, %v940
      %v942 = vpop.f32.mrb[0].mxu0
      %943 = vmatprep.mubr.bf16.mxu0 0
      %944 = vmatmul.mubr.bf16.gmra.mrb[0].mxu0 %v882
      %v945 = vpop.f32.mrb[0].mxu0
      %v946 = vadd.f32 0.0, %v945
      %v947 = vpop.f32.mrb[0].mxu0
      %v948 = vpop.f32.mrb[0].mxu0
      %v949 = vadd.f32 0.0, %v948
      %v950 = vpop.f32.mrb[0].mxu0
      %951 = vdwg.mxu0
      %v952 = vadd.f32 %v822, %v922
      %v953 = vadd.f32 %v823, %v925
      %v954 = vadd.f32 %v824, %v930
      %v955 = vadd.f32 %v825, %v933
      %v956 = vadd.f32 %v826, %v938
      %v957 = vadd.f32 %v827, %v941
      %v958 = vadd.f32 %v828, %v946
      %v959 = vadd.f32 %v829, %v949
      %v960 = vld [vmem:[%s2] sm:$0x1]
      %v962 = vlaneseq
      %v963 = vshrl.u32 %v962, 7
      %v964 = vsub.s32 0, %v963
      %v965 = vrot.slane %v960, %v964
      %v967 = vadd.f32 %v952, %v965
      %v968 = vadd.f32 %v953, %v965
      %v969 = vadd.f32 %v954, %v965
      %v970 = vadd.f32 %v955, %v965
      %v971 = vadd.f32 %v956, %v965
      %v972 = vadd.f32 %v957, %v965
      %v973 = vadd.f32 %v958, %v965
      %v974 = vadd.f32 %v959, %v965
      %v975 = vmax.f32 %v967, 0.0
      %v976 = vmax.f32 %v968, 0.0
      %v977 = vmax.f32 %v969, 0.0
      %v978 = vmax.f32 %v970, 0.0
      %v979 = vmax.f32 %v971, 0.0
      %v980 = vmax.f32 %v972, 0.0
      %v981 = vmax.f32 %v973, 0.0
      %v982 = vmax.f32 %v974, 0.0
      %v983 = vpack.c.bf16 %v976, %v975
      %v984 = vpack.c.bf16 %v978, %v977
      %v985 = vpack.c.bf16 %v980, %v979
      %v986 = vpack.c.bf16 %v982, %v981
      %v987 = vld [vmem:[%s3] sm:$0xf]
      %v988 = vld [vmem:[%s3 + $0x4] sm:$0xf]
      %v989 = vld [vmem:[%s3 + $0x8] sm:$0xf]
      %v990 = vld [vmem:[%s3 + $0xc] sm:$0xf]
      %v991 = vld [vmem:[%s3 + $0x10] sm:$0xf]
      %v992 = vld [vmem:[%s3 + $0x14] sm:$0xf]
      %v993 = vld [vmem:[%s3 + $0x18] sm:$0xf]
      %v994 = vld [vmem:[%s3 + $0x1c] sm:$0xf]
      %v995 = vrot.slane %v975, 2
      %v996 = vrot.slane %v976, 2
      %v997 = vrot.slane %v977, 2
      %v998 = vrot.slane %v978, 2
      %v999 = vrot.slane %v979, 2
      %v1000 = vrot.slane %v980, 2
      %v1001 = vrot.slane %v981, 2
      %v1002 = vrot.slane %v982, 2
      %v1003 = vsel %vm578, %v1001, %v1002
      %v1004 = vsel %vm578, %v1000, %v1001
      %v1005 = vsel %vm578, %v999, %v1000
      %v1006 = vsel %vm578, %v998, %v999
      %v1007 = vsel %vm578, %v997, %v998
      %v1008 = vsel %vm578, %v996, %v997
      %v1009 = vsel %vm578, %v995, %v996
      %v1010 = vsel %vm578, %v1002, %v995
      %v1011 = vpack.c.bf16 %v1008, %v1009
      %v1012 = vpack.c.bf16 %v1006, %v1007
      %v1013 = vpack.c.bf16 %v1004, %v1005
      %v1014 = vpack.c.bf16 %v1010, %v1003
      %s1015 = scalar_lea.vmem %s3, 32
      %v1016 = vld [vmem:[%s1015] sm:$0xf]
      %v1017 = vld [vmem:[%s1015 + $0x4] sm:$0xf]
      %v1018 = vld [vmem:[%s1015 + $0x8] sm:$0xf]
      %v1019 = vld [vmem:[%s1015 + $0xc] sm:$0xf]
      %v1020 = vld [vmem:[%s1015 + $0x10] sm:$0xf]
      %v1021 = vld [vmem:[%s1015 + $0x14] sm:$0xf]
      %v1022 = vld [vmem:[%s1015 + $0x18] sm:$0xf]
      %v1023 = vld [vmem:[%s1015 + $0x1c] sm:$0xf]
      %v1032 = vunpack.c.l.b16 %v1016
      %v1033 = vunpack.c.l.b16 %v1017
      %v1034 = vunpack.c.l.b16 %v1018
      %v1035 = vunpack.c.l.b16 %v1019
      %v1036 = vunpack.c.l.b16 %v1020
      %v1037 = vunpack.c.l.b16 %v1021
      %v1038 = vunpack.c.l.b16 %v1022
      %v1039 = vunpack.c.l.b16 %v1023
      %v1040 = vpack.c.b16 %v1033, %v1032
      %v1041 = vpack.c.b16 %v1035, %v1034
      %v1042 = vpack.c.b16 %v1037, %v1036
      %v1043 = vpack.c.b16 %v1039, %v1038
      %vm1048 = vcmask 523264
      %v1050 = vsel %vm1048, %v1011, 0
      %v1053 = vsel %vm1048, %v1012, 0
      %v1056 = vsel %vm1048, %v1013, 0
      %v1059 = vsel %vm1048, %v1014, 0
      %1061 = vmatprep.subr.bf16.mxu0 0
      %1062 = vmatpush1.bf16.msra.mxu0 %v1040
      %1063 = vmatprep.subr.bf16.mxu0 0
      %1064 = vmatpush1.bf16.msra.mxu0 %v1041
      %1065 = vmatprep.subr.bf16.mxu0 0
      %1066 = vmatpush1.bf16.msra.mxu0 %v1042
      %1067 = vmatprep.subr.bf16.mxu0 0
      %1068 = vmatpush1.bf16.msra.mxu0 %v1043
      %1069 = vmatprep.subr.bf16.mxu0 0
      %1070 = vmatpush1.bf16.msra.mxu0 0
      %1071 = vmatprep.subr.bf16.mxu0 0
      %1072 = vmatpush1.bf16.msra.mxu0 0
      %1073 = vmatprep.subr.bf16.mxu0 0
      %1074 = vmatpush1.bf16.msra.mxu0 0
      %1075 = vmatprep.subr.bf16.mxu0 0
      %1076 = vmatpush1.bf16.msra.mxu0 0
      %1077 = vmatprep.subr.bf16.mxu0 0
      %1078 = vmatpush1.bf16.msra.mxu0 0
      %1079 = vmatprep.subr.bf16.mxu0 0
      %1080 = vmatpush1.bf16.msra.mxu0 0
      %1081 = vmatprep.subr.bf16.mxu0 0
      %1082 = vmatpush1.bf16.msra.mxu0 0
      %1083 = vmatprep.subr.bf16.mxu0 0
      %1084 = vmatpush1.bf16.msra.mxu0 0
      %1085 = vmatprep.subr.bf16.mxu0 0
      %1086 = vmatpush1.bf16.msra.mxu0 0
      %1087 = vmatprep.subr.bf16.mxu0 0
      %1088 = vmatpush1.bf16.msra.mxu0 0
      %1089 = vmatprep.subr.bf16.mxu0 0
      %1090 = vmatpush1.bf16.msra.mxu0 0
      %1091 = vmatprep.subr.bf16.mxu0 0
      %1092 = vmatpush1.bf16.msra.mxu0 0
      %1093 = vmatprep.mubr.bf16.mxu0 0
      %1094 = vmatmul.mubr.bf16.gmra.mrb[0].mxu0 %v1050
      %v1095 = vpop.f32.mrb[0].mxu0
      %v1096 = vadd.f32 0.0, %v1095
      %v1097 = vpop.f32.mrb[0].mxu0
      %v1098 = vpop.f32.mrb[0].mxu0
      %v1099 = vadd.f32 0.0, %v1098
      %v1100 = vpop.f32.mrb[0].mxu0
      %1101 = vmatprep.mubr.bf16.mxu0 0
      %1102 = vmatmul.mubr.bf16.gmra.mrb[0].mxu0 %v1053
      %v1103 = vpop.f32.mrb[0].mxu0
      %v1104 = vadd.f32 0.0, %v1103
      %v1105 = vpop.f32.mrb[0].mxu0
      %v1106 = vpop.f32.mrb[0].mxu0
      %v1107 = vadd.f32 0.0, %v1106
      %v1108 = vpop.f32.mrb[0].mxu0
      %1109 = vmatprep.mubr.bf16.mxu0 0
      %1110 = vmatmul.mubr.bf16.gmra.mrb[0].mxu0 %v1056
      %v1111 = vpop.f32.mrb[0].mxu0
      %v1112 = vadd.f32 0.0, %v1111
      %v1113 = vpop.f32.mrb[0].mxu0
      %v1114 = vpop.f32.mrb[0].mxu0
      %v1115 = vadd.f32 0.0, %v1114
      %v1116 = vpop.f32.mrb[0].mxu0
      %1117 = vmatprep.mubr.bf16.mxu0 0
      %1118 = vmatmul.mubr.bf16.gmra.mrb[0].mxu0 %v1059
      %v1119 = vpop.f32.mrb[0].mxu0
      %v1120 = vadd.f32 0.0, %v1119
      %v1121 = vpop.f32.mrb[0].mxu0
      %v1122 = vpop.f32.mrb[0].mxu0
      %v1123 = vadd.f32 0.0, %v1122
      %v1124 = vpop.f32.mrb[0].mxu0
      %1125 = vdwg.mxu0
      %v1134 = vunpack.c.l.b16 %v987
      %v1135 = vunpack.c.l.b16 %v988
      %v1136 = vunpack.c.l.b16 %v989
      %v1137 = vunpack.c.l.b16 %v990
      %v1138 = vunpack.c.l.b16 %v991
      %v1139 = vunpack.c.l.b16 %v992
      %v1140 = vunpack.c.l.b16 %v993
      %v1141 = vunpack.c.l.b16 %v994
      %v1142 = vpack.c.b16 %v1135, %v1134
      %v1143 = vpack.c.b16 %v1137, %v1136
      %v1144 = vpack.c.b16 %v1139, %v1138
      %v1145 = vpack.c.b16 %v1141, %v1140
      %v1151 = vsel %vm1048, %v983, 0
      %v1154 = vsel %vm1048, %v984, 0
      %v1157 = vsel %vm1048, %v985, 0
      %v1160 = vsel %vm1048, %v986, 0
      %1162 = vmatprep.subr.bf16.mxu0 0
      %1163 = vmatpush1.bf16.msra.mxu0 %v1142
      %1164 = vmatprep.subr.bf16.mxu0 0
      %1165 = vmatpush1.bf16.msra.mxu0 %v1143
      %1166 = vmatprep.subr.bf16.mxu0 0
      %1167 = vmatpush1.bf16.msra.mxu0 %v1144
      %1168 = vmatprep.subr.bf16.mxu0 0
      %1169 = vmatpush1.bf16.msra.mxu0 %v1145
      %1170 = vmatprep.subr.bf16.mxu0 0
      %1171 = vmatpush1.bf16.msra.mxu0 0
      %1172 = vmatprep.subr.bf16.mxu0 0
      %1173 = vmatpush1.bf16.msra.mxu0 0
      %1174 = vmatprep.subr.bf16.mxu0 0
      %1175 = vmatpush1.bf16.msra.mxu0 0
      %1176 = vmatprep.subr.bf16.mxu0 0
      %1177 = vmatpush1.bf16.msra.mxu0 0
      %1178 = vmatprep.subr.bf16.mxu0 0
      %1179 = vmatpush1.bf16.msra.mxu0 0
      %1180 = vmatprep.subr.bf16.mxu0 0
      %1181 = vmatpush1.bf16.msra.mxu0 0
      %1182 = vmatprep.subr.bf16.mxu0 0
      %1183 = vmatpush1.bf16.msra.mxu0 0
      %1184 = vmatprep.subr.bf16.mxu0 0
      %1185 = vmatpush1.bf16.msra.mxu0 0
      %1186 = vmatprep.subr.bf16.mxu0 0
      %1187 = vmatpush1.bf16.msra.mxu0 0
      %1188 = vmatprep.subr.bf16.mxu0 0
      %1189 = vmatpush1.bf16.msra.mxu0 0
      %1190 = vmatprep.subr.bf16.mxu0 0
      %1191 = vmatpush1.bf16.msra.mxu0 0
      %1192 = vmatprep.subr.bf16.mxu0 0
      %1193 = vmatpush1.bf16.msra.mxu0 0
      %1194 = vmatprep.mubr.bf16.mxu0 0
      %1195 = vmatmul.mubr.bf16.gmra.mrb[0].mxu0 %v1151
      %v1196 = vpop.f32.mrb[0].mxu0
      %v1197 = vadd.f32 %v1096, %v1196
      %v1198 = vpop.f32.mrb[0].mxu0
      %v1199 = vpop.f32.mrb[0].mxu0
      %v1200 = vadd.f32 %v1099, %v1199
      %v1201 = vpop.f32.mrb[0].mxu0
      %1202 = vmatprep.mubr.bf16.mxu0 0
      %1203 = vmatmul.mubr.bf16.gmra.mrb[0].mxu0 %v1154
      %v1204 = vpop.f32.mrb[0].mxu0
      %v1205 = vadd.f32 %v1104, %v1204
      %v1206 = vpop.f32.mrb[0].mxu0
      %v1207 = vpop.f32.mrb[0].mxu0
      %v1208 = vadd.f32 %v1107, %v1207
      %v1209 = vpop.f32.mrb[0].mxu0
      %1210 = vmatprep.mubr.bf16.mxu0 0
      %1211 = vmatmul.mubr.bf16.gmra.mrb[0].mxu0 %v1157
      %v1212 = vpop.f32.mrb[0].mxu0
      %v1213 = vadd.f32 %v1112, %v1212
      %v1214 = vpop.f32.mrb[0].mxu0
      %v1215 = vpop.f32.mrb[0].mxu0
      %v1216 = vadd.f32 %v1115, %v1215
      %v1217 = vpop.f32.mrb[0].mxu0
      %1218 = vmatprep.mubr.bf16.mxu0 0
      %1219 = vmatmul.mubr.bf16.gmra.mrb[0].mxu0 %v1160
      %v1220 = vpop.f32.mrb[0].mxu0
      %v1221 = vadd.f32 %v1120, %v1220
      %v1222 = vpop.f32.mrb[0].mxu0
      %v1223 = vpop.f32.mrb[0].mxu0
      %v1224 = vadd.f32 %v1123, %v1223
      %v1225 = vpop.f32.mrb[0].mxu0
      %1226 = vdwg.mxu0
      %v1227 = vrot.slane %v975, 4
      %v1228 = vrot.slane %v976, 4
      %v1229 = vrot.slane %v977, 4
      %v1230 = vrot.slane %v978, 4
      %v1231 = vrot.slane %v979, 4
      %v1232 = vrot.slane %v980, 4
      %v1233 = vrot.slane %v981, 4
      %v1234 = vrot.slane %v982, 4
      %v1235 = vsel %vm838, %v1233, %v1234
      %v1236 = vsel %vm838, %v1232, %v1233
      %v1237 = vsel %vm838, %v1231, %v1232
      %v1238 = vsel %vm838, %v1230, %v1231
      %v1239 = vsel %vm838, %v1229, %v1230
      %v1240 = vsel %vm838, %v1228, %v1229
      %v1241 = vsel %vm838, %v1227, %v1228
      %v1242 = vsel %vm838, %v1234, %v1227
      %v1243 = vpack.c.bf16 %v1240, %v1241
      %v1244 = vpack.c.bf16 %v1238, %v1239
      %v1245 = vpack.c.bf16 %v1236, %v1237
      %v1246 = vpack.c.bf16 %v1242, %v1235
      %s1247 = scalar_lea.vmem %s3, 64
      %v1248 = vld [vmem:[%s1247] sm:$0xf]
      %v1249 = vld [vmem:[%s1247 + $0x4] sm:$0xf]
      %v1250 = vld [vmem:[%s1247 + $0x8] sm:$0xf]
      %v1251 = vld [vmem:[%s1247 + $0xc] sm:$0xf]
      %v1252 = vld [vmem:[%s1247 + $0x10] sm:$0xf]
      %v1253 = vld [vmem:[%s1247 + $0x14] sm:$0xf]
      %v1254 = vld [vmem:[%s1247 + $0x18] sm:$0xf]
      %v1255 = vld [vmem:[%s1247 + $0x1c] sm:$0xf]
      %v1264 = vunpack.c.l.b16 %v1248
      %v1265 = vunpack.c.l.b16 %v1249
      %v1266 = vunpack.c.l.b16 %v1250
      %v1267 = vunpack.c.l.b16 %v1251
      %v1268 = vunpack.c.l.b16 %v1252
      %v1269 = vunpack.c.l.b16 %v1253
      %v1270 = vunpack.c.l.b16 %v1254
      %v1271 = vunpack.c.l.b16 %v1255
      %v1272 = vpack.c.b16 %v1265, %v1264
      %v1273 = vpack.c.b16 %v1267, %v1266
      %v1274 = vpack.c.b16 %v1269, %v1268
      %v1275 = vpack.c.b16 %v1271, %v1270
      %v1281 = vsel %vm1048, %v1243, 0
      %v1284 = vsel %vm1048, %v1244, 0
      %v1287 = vsel %vm1048, %v1245, 0
      %v1290 = vsel %vm1048, %v1246, 0
      %1292 = vmatprep.subr.bf16.mxu0 0
      %1293 = vmatpush1.bf16.msra.mxu0 %v1272
      %1294 = vmatprep.subr.bf16.mxu0 0
      %1295 = vmatpush1.bf16.msra.mxu0 %v1273
      %1296 = vmatprep.subr.bf16.mxu0 0
      %1297 = vmatpush1.bf16.msra.mxu0 %v1274
      %1298 = vmatprep.subr.bf16.mxu0 0
      %1299 = vmatpush1.bf16.msra.mxu0 %v1275
      %1300 = vmatprep.subr.bf16.mxu0 0
      %1301 = vmatpush1.bf16.msra.mxu0 0
      %1302 = vmatprep.subr.bf16.mxu0 0
      %1303 = vmatpush1.bf16.msra.mxu0 0
      %1304 = vmatprep.subr.bf16.mxu0 0
      %1305 = vmatpush1.bf16.msra.mxu0 0
      %1306 = vmatprep.subr.bf16.mxu0 0
      %1307 = vmatpush1.bf16.msra.mxu0 0
      %1308 = vmatprep.subr.bf16.mxu0 0
      %1309 = vmatpush1.bf16.msra.mxu0 0
      %1310 = vmatprep.subr.bf16.mxu0 0
      %1311 = vmatpush1.bf16.msra.mxu0 0
      %1312 = vmatprep.subr.bf16.mxu0 0
      %1313 = vmatpush1.bf16.msra.mxu0 0
      %1314 = vmatprep.subr.bf16.mxu0 0
      %1315 = vmatpush1.bf16.msra.mxu0 0
      %1316 = vmatprep.subr.bf16.mxu0 0
      %1317 = vmatpush1.bf16.msra.mxu0 0
      %1318 = vmatprep.subr.bf16.mxu0 0
      %1319 = vmatpush1.bf16.msra.mxu0 0
      %1320 = vmatprep.subr.bf16.mxu0 0
      %1321 = vmatpush1.bf16.msra.mxu0 0
      %1322 = vmatprep.subr.bf16.mxu0 0
      %1323 = vmatpush1.bf16.msra.mxu0 0
      %1324 = vmatprep.mubr.bf16.mxu0 0
      %1325 = vmatmul.mubr.bf16.gmra.mrb[0].mxu0 %v1281
      %v1326 = vpop.f32.mrb[0].mxu0
      %v1327 = vadd.f32 0.0, %v1326
      %v1328 = vpop.f32.mrb[0].mxu0
      %v1329 = vpop.f32.mrb[0].mxu0
      %v1330 = vadd.f32 0.0, %v1329
      %v1331 = vpop.f32.mrb[0].mxu0
      %1332 = vmatprep.mubr.bf16.mxu0 0
      %1333 = vmatmul.mubr.bf16.gmra.mrb[0].mxu0 %v1284
      %v1334 = vpop.f32.mrb[0].mxu0
      %v1335 = vadd.f32 0.0, %v1334
      %v1336 = vpop.f32.mrb[0].mxu0
      %v1337 = vpop.f32.mrb[0].mxu0
      %v1338 = vadd.f32 0.0, %v1337
      %v1339 = vpop.f32.mrb[0].mxu0
      %1340 = vmatprep.mubr.bf16.mxu0 0
      %1341 = vmatmul.mubr.bf16.gmra.mrb[0].mxu0 %v1287
      %v1342 = vpop.f32.mrb[0].mxu0
      %v1343 = vadd.f32 0.0, %v1342
      %v1344 = vpop.f32.mrb[0].mxu0
      %v1345 = vpop.f32.mrb[0].mxu0
      %v1346 = vadd.f32 0.0, %v1345
      %v1347 = vpop.f32.mrb[0].mxu0
      %1348 = vmatprep.mubr.bf16.mxu0 0
      %1349 = vmatmul.mubr.bf16.gmra.mrb[0].mxu0 %v1290
      %v1350 = vpop.f32.mrb[0].mxu0
      %v1351 = vadd.f32 0.0, %v1350
      %v1352 = vpop.f32.mrb[0].mxu0
      %v1353 = vpop.f32.mrb[0].mxu0
      %v1354 = vadd.f32 0.0, %v1353
      %v1355 = vpop.f32.mrb[0].mxu0
      %1356 = vdwg.mxu0
      %v1357 = vadd.f32 %v1197, %v1327
      %v1358 = vadd.f32 %v1200, %v1330
      %v1359 = vadd.f32 %v1205, %v1335
      %v1360 = vadd.f32 %v1208, %v1338
      %v1361 = vadd.f32 %v1213, %v1343
      %v1362 = vadd.f32 %v1216, %v1346
      %v1363 = vadd.f32 %v1221, %v1351
      %v1364 = vadd.f32 %v1224, %v1354
      %v1365 = vld [vmem:[%s4] sm:$0x1]
      %v1367 = vlaneseq
      %v1368 = vshrl.u32 %v1367, 7
      %v1369 = vsub.s32 0, %v1368
      %v1370 = vrot.slane %v1365, %v1369
      %v1372 = vadd.f32 %v1357, %v1370
      %v1373 = vadd.f32 %v1358, %v1370
      %v1374 = vadd.f32 %v1359, %v1370
      %v1375 = vadd.f32 %v1360, %v1370
      %v1376 = vadd.f32 %v1361, %v1370
      %v1377 = vadd.f32 %v1362, %v1370
      %v1378 = vadd.f32 %v1363, %v1370
      %v1379 = vadd.f32 %v1364, %v1370
      %v1380 = vmax.f32 %v1372, 0.0
      %v1381 = vmax.f32 %v1373, 0.0
      %v1382 = vmax.f32 %v1374, 0.0
      %v1383 = vmax.f32 %v1375, 0.0
      %v1384 = vmax.f32 %v1376, 0.0
      %v1385 = vmax.f32 %v1377, 0.0
      %v1386 = vmax.f32 %v1378, 0.0
      %v1387 = vmax.f32 %v1379, 0.0
      %v1388 = vpack.c.bf16 %v1381, %v1380
      %v1389 = vpack.c.bf16 %v1383, %v1382
      %v1390 = vpack.c.bf16 %v1385, %v1384
      %v1391 = vpack.c.bf16 %v1387, %v1386
      %v1392 = vld [vmem:[%s5] sm:$0xf]
      %v1393 = vld [vmem:[%s5 + $0x4] sm:$0xf]
      %v1394 = vld [vmem:[%s5 + $0x8] sm:$0xf]
      %v1395 = vld [vmem:[%s5 + $0xc] sm:$0xf]
      %v1396 = vld [vmem:[%s5 + $0x10] sm:$0xf]
      %v1397 = vld [vmem:[%s5 + $0x14] sm:$0xf]
      %v1398 = vld [vmem:[%s5 + $0x18] sm:$0xf]
      %v1399 = vld [vmem:[%s5 + $0x1c] sm:$0xf]
      %v1400 = vrot.slane %v1380, 2
      %v1401 = vrot.slane %v1381, 2
      %v1402 = vrot.slane %v1382, 2
      %v1403 = vrot.slane %v1383, 2
      %v1404 = vrot.slane %v1384, 2
      %v1405 = vrot.slane %v1385, 2
      %v1406 = vrot.slane %v1386, 2
      %v1407 = vrot.slane %v1387, 2
      %v1408 = vsel %vm578, %v1406, %v1407
      %v1409 = vsel %vm578, %v1405, %v1406
      %v1410 = vsel %vm578, %v1404, %v1405
      %v1411 = vsel %vm578, %v1403, %v1404
      %v1412 = vsel %vm578, %v1402, %v1403
      %v1413 = vsel %vm578, %v1401, %v1402
      %v1414 = vsel %vm578, %v1400, %v1401
      %v1415 = vsel %vm578, %v1407, %v1400
      %v1416 = vpack.c.bf16 %v1413, %v1414
      %v1417 = vpack.c.bf16 %v1411, %v1412
      %v1418 = vpack.c.bf16 %v1409, %v1410
      %v1419 = vpack.c.bf16 %v1415, %v1408
      %s1420 = scalar_lea.vmem %s5, 32
      %v1421 = vld [vmem:[%s1420] sm:$0xf]
      %v1422 = vld [vmem:[%s1420 + $0x4] sm:$0xf]
      %v1423 = vld [vmem:[%s1420 + $0x8] sm:$0xf]
      %v1424 = vld [vmem:[%s1420 + $0xc] sm:$0xf]
      %v1425 = vld [vmem:[%s1420 + $0x10] sm:$0xf]
      %v1426 = vld [vmem:[%s1420 + $0x14] sm:$0xf]
      %v1427 = vld [vmem:[%s1420 + $0x18] sm:$0xf]
      %v1428 = vld [vmem:[%s1420 + $0x1c] sm:$0xf]
      %v1437 = vunpack.c.l.b16 %v1421
      %v1438 = vunpack.c.l.b16 %v1422
      %v1439 = vunpack.c.l.b16 %v1423
      %v1440 = vunpack.c.l.b16 %v1424
      %v1441 = vunpack.c.l.b16 %v1425
      %v1442 = vunpack.c.l.b16 %v1426
      %v1443 = vunpack.c.l.b16 %v1427
      %v1444 = vunpack.c.l.b16 %v1428
      %v1445 = vpack.c.b16 %v1438, %v1437
      %v1446 = vpack.c.b16 %v1440, %v1439
      %v1447 = vpack.c.b16 %v1442, %v1441
      %v1448 = vpack.c.b16 %v1444, %v1443
      %v1454 = vsel %vm1048, %v1416, 0
      %v1457 = vsel %vm1048, %v1417, 0
      %v1460 = vsel %vm1048, %v1418, 0
      %v1463 = vsel %vm1048, %v1419, 0
      %1465 = vmatprep.subr.bf16.mxu0 0
      %1466 = vmatpush1.bf16.msra.mxu0 %v1445
      %1467 = vmatprep.subr.bf16.mxu0 0
      %1468 = vmatpush1.bf16.msra.mxu0 %v1446
      %1469 = vmatprep.subr.bf16.mxu0 0
      %1470 = vmatpush1.bf16.msra.mxu0 %v1447
      %1471 = vmatprep.subr.bf16.mxu0 0
      %1472 = vmatpush1.bf16.msra.mxu0 %v1448
      %1473 = vmatprep.subr.bf16.mxu0 0
      %1474 = vmatpush1.bf16.msra.mxu0 0
      %1475 = vmatprep.subr.bf16.mxu0 0
      %1476 = vmatpush1.bf16.msra.mxu0 0
      %1477 = vmatprep.subr.bf16.mxu0 0
      %1478 = vmatpush1.bf16.msra.mxu0 0
      %1479 = vmatprep.subr.bf16.mxu0 0
      %1480 = vmatpush1.bf16.msra.mxu0 0
      %1481 = vmatprep.subr.bf16.mxu0 0
      %1482 = vmatpush1.bf16.msra.mxu0 0
      %1483 = vmatprep.subr.bf16.mxu0 0
      %1484 = vmatpush1.bf16.msra.mxu0 0
      %1485 = vmatprep.subr.bf16.mxu0 0
      %1486 = vmatpush1.bf16.msra.mxu0 0
      %1487 = vmatprep.subr.bf16.mxu0 0
      %1488 = vmatpush1.bf16.msra.mxu0 0
      %1489 = vmatprep.subr.bf16.mxu0 0
      %1490 = vmatpush1.bf16.msra.mxu0 0
      %1491 = vmatprep.subr.bf16.mxu0 0
      %1492 = vmatpush1.bf16.msra.mxu0 0
      %1493 = vmatprep.subr.bf16.mxu0 0
      %1494 = vmatpush1.bf16.msra.mxu0 0
      %1495 = vmatprep.subr.bf16.mxu0 0
      %1496 = vmatpush1.bf16.msra.mxu0 0
      %1497 = vmatprep.mubr.bf16.mxu0 0
      %1498 = vmatmul.mubr.bf16.gmra.mrb[0].mxu0 %v1454
      %v1499 = vpop.f32.mrb[0].mxu0
      %v1500 = vadd.f32 0.0, %v1499
      %v1501 = vpop.f32.mrb[0].mxu0
      %v1502 = vpop.f32.mrb[0].mxu0
      %v1503 = vadd.f32 0.0, %v1502
      %v1504 = vpop.f32.mrb[0].mxu0
      %1505 = vmatprep.mubr.bf16.mxu0 0
      %1506 = vmatmul.mubr.bf16.gmra.mrb[0].mxu0 %v1457
      %v1507 = vpop.f32.mrb[0].mxu0
      %v1508 = vadd.f32 0.0, %v1507
      %v1509 = vpop.f32.mrb[0].mxu0
      %v1510 = vpop.f32.mrb[0].mxu0
      %v1511 = vadd.f32 0.0, %v1510
      %v1512 = vpop.f32.mrb[0].mxu0
      %1513 = vmatprep.mubr.bf16.mxu0 0
      %1514 = vmatmul.mubr.bf16.gmra.mrb[0].mxu0 %v1460
      %v1515 = vpop.f32.mrb[0].mxu0
      %v1516 = vadd.f32 0.0, %v1515
      %v1517 = vpop.f32.mrb[0].mxu0
      %v1518 = vpop.f32.mrb[0].mxu0
      %v1519 = vadd.f32 0.0, %v1518
      %v1520 = vpop.f32.mrb[0].mxu0
      %1521 = vmatprep.mubr.bf16.mxu0 0
      %1522 = vmatmul.mubr.bf16.gmra.mrb[0].mxu0 %v1463
      %v1523 = vpop.f32.mrb[0].mxu0
      %v1524 = vadd.f32 0.0, %v1523
      %v1525 = vpop.f32.mrb[0].mxu0
      %v1526 = vpop.f32.mrb[0].mxu0
      %v1527 = vadd.f32 0.0, %v1526
      %v1528 = vpop.f32.mrb[0].mxu0
      %1529 = vdwg.mxu0
      %v1538 = vunpack.c.l.b16 %v1392
      %v1539 = vunpack.c.l.b16 %v1393
      %v1540 = vunpack.c.l.b16 %v1394
      %v1541 = vunpack.c.l.b16 %v1395
      %v1542 = vunpack.c.l.b16 %v1396
      %v1543 = vunpack.c.l.b16 %v1397
      %v1544 = vunpack.c.l.b16 %v1398
      %v1545 = vunpack.c.l.b16 %v1399
      %v1546 = vpack.c.b16 %v1539, %v1538
      %v1547 = vpack.c.b16 %v1541, %v1540
      %v1548 = vpack.c.b16 %v1543, %v1542
      %v1549 = vpack.c.b16 %v1545, %v1544
      %v1555 = vsel %vm1048, %v1388, 0
      %v1558 = vsel %vm1048, %v1389, 0
      %v1561 = vsel %vm1048, %v1390, 0
      %v1564 = vsel %vm1048, %v1391, 0
      %1566 = vmatprep.subr.bf16.mxu0 0
      %1567 = vmatpush1.bf16.msra.mxu0 %v1546
      %1568 = vmatprep.subr.bf16.mxu0 0
      %1569 = vmatpush1.bf16.msra.mxu0 %v1547
      %1570 = vmatprep.subr.bf16.mxu0 0
      %1571 = vmatpush1.bf16.msra.mxu0 %v1548
      %1572 = vmatprep.subr.bf16.mxu0 0
      %1573 = vmatpush1.bf16.msra.mxu0 %v1549
      %1574 = vmatprep.subr.bf16.mxu0 0
      %1575 = vmatpush1.bf16.msra.mxu0 0
      %1576 = vmatprep.subr.bf16.mxu0 0
      %1577 = vmatpush1.bf16.msra.mxu0 0
      %1578 = vmatprep.subr.bf16.mxu0 0
      %1579 = vmatpush1.bf16.msra.mxu0 0
      %1580 = vmatprep.subr.bf16.mxu0 0
      %1581 = vmatpush1.bf16.msra.mxu0 0
      %1582 = vmatprep.subr.bf16.mxu0 0
      %1583 = vmatpush1.bf16.msra.mxu0 0
      %1584 = vmatprep.subr.bf16.mxu0 0
      %1585 = vmatpush1.bf16.msra.mxu0 0
      %1586 = vmatprep.subr.bf16.mxu0 0
      %1587 = vmatpush1.bf16.msra.mxu0 0
      %1588 = vmatprep.subr.bf16.mxu0 0
      %1589 = vmatpush1.bf16.msra.mxu0 0
      %1590 = vmatprep.subr.bf16.mxu0 0
      %1591 = vmatpush1.bf16.msra.mxu0 0
      %1592 = vmatprep.subr.bf16.mxu0 0
      %1593 = vmatpush1.bf16.msra.mxu0 0
      %1594 = vmatprep.subr.bf16.mxu0 0
      %1595 = vmatpush1.bf16.msra.mxu0 0
      %1596 = vmatprep.subr.bf16.mxu0 0
      %1597 = vmatpush1.bf16.msra.mxu0 0
      %1598 = vmatprep.mubr.bf16.mxu0 0
      %1599 = vmatmul.mubr.bf16.gmra.mrb[0].mxu0 %v1555
      %v1600 = vpop.f32.mrb[0].mxu0
      %v1601 = vadd.f32 %v1500, %v1600
      %v1602 = vpop.f32.mrb[0].mxu0
      %v1603 = vpop.f32.mrb[0].mxu0
      %v1604 = vadd.f32 %v1503, %v1603
      %v1605 = vpop.f32.mrb[0].mxu0
      %1606 = vmatprep.mubr.bf16.mxu0 0
      %1607 = vmatmul.mubr.bf16.gmra.mrb[0].mxu0 %v1558
      %v1608 = vpop.f32.mrb[0].mxu0
      %v1609 = vadd.f32 %v1508, %v1608
      %v1610 = vpop.f32.mrb[0].mxu0
      %v1611 = vpop.f32.mrb[0].mxu0
      %v1612 = vadd.f32 %v1511, %v1611
      %v1613 = vpop.f32.mrb[0].mxu0
      %1614 = vmatprep.mubr.bf16.mxu0 0
      %1615 = vmatmul.mubr.bf16.gmra.mrb[0].mxu0 %v1561
      %v1616 = vpop.f32.mrb[0].mxu0
      %v1617 = vadd.f32 %v1516, %v1616
      %v1618 = vpop.f32.mrb[0].mxu0
      %v1619 = vpop.f32.mrb[0].mxu0
      %v1620 = vadd.f32 %v1519, %v1619
      %v1621 = vpop.f32.mrb[0].mxu0
      %1622 = vmatprep.mubr.bf16.mxu0 0
      %1623 = vmatmul.mubr.bf16.gmra.mrb[0].mxu0 %v1564
      %v1624 = vpop.f32.mrb[0].mxu0
      %v1625 = vadd.f32 %v1524, %v1624
      %v1626 = vpop.f32.mrb[0].mxu0
      %v1627 = vpop.f32.mrb[0].mxu0
      %v1628 = vadd.f32 %v1527, %v1627
      %v1629 = vpop.f32.mrb[0].mxu0
      %1630 = vdwg.mxu0
      %v1631 = vrot.slane %v1380, 4
      %v1632 = vrot.slane %v1381, 4
      %v1633 = vrot.slane %v1382, 4
      %v1634 = vrot.slane %v1383, 4
      %v1635 = vrot.slane %v1384, 4
      %v1636 = vrot.slane %v1385, 4
      %v1637 = vrot.slane %v1386, 4
      %v1638 = vrot.slane %v1387, 4
      %v1639 = vsel %vm838, %v1637, %v1638
      %v1640 = vsel %vm838, %v1636, %v1637
      %v1641 = vsel %vm838, %v1635, %v1636
      %v1642 = vsel %vm838, %v1634, %v1635
      %v1643 = vsel %vm838, %v1633, %v1634
      %v1644 = vsel %vm838, %v1632, %v1633
      %v1645 = vsel %vm838, %v1631, %v1632
      %v1646 = vsel %vm838, %v1638, %v1631
      %v1647 = vpack.c.bf16 %v1644, %v1645
      %v1648 = vpack.c.bf16 %v1642, %v1643
      %v1649 = vpack.c.bf16 %v1640, %v1641
      %v1650 = vpack.c.bf16 %v1646, %v1639
      %s1651 = scalar_lea.vmem %s5, 64
      %v1652 = vld [vmem:[%s1651] sm:$0xf]
      %v1653 = vld [vmem:[%s1651 + $0x4] sm:$0xf]
      %v1654 = vld [vmem:[%s1651 + $0x8] sm:$0xf]
      %v1655 = vld [vmem:[%s1651 + $0xc] sm:$0xf]
      %v1656 = vld [vmem:[%s1651 + $0x10] sm:$0xf]
      %v1657 = vld [vmem:[%s1651 + $0x14] sm:$0xf]
      %v1658 = vld [vmem:[%s1651 + $0x18] sm:$0xf]
      %v1659 = vld [vmem:[%s1651 + $0x1c] sm:$0xf]
      %v1668 = vunpack.c.l.b16 %v1652
      %v1669 = vunpack.c.l.b16 %v1653
      %v1670 = vunpack.c.l.b16 %v1654
      %v1671 = vunpack.c.l.b16 %v1655
      %v1672 = vunpack.c.l.b16 %v1656
      %v1673 = vunpack.c.l.b16 %v1657
      %v1674 = vunpack.c.l.b16 %v1658
      %v1675 = vunpack.c.l.b16 %v1659
      %v1676 = vpack.c.b16 %v1669, %v1668
      %v1677 = vpack.c.b16 %v1671, %v1670
      %v1678 = vpack.c.b16 %v1673, %v1672
      %v1679 = vpack.c.b16 %v1675, %v1674
      %v1685 = vsel %vm1048, %v1647, 0
      %v1688 = vsel %vm1048, %v1648, 0
      %v1691 = vsel %vm1048, %v1649, 0
      %v1694 = vsel %vm1048, %v1650, 0
      %1696 = vmatprep.subr.bf16.mxu0 0
      %1697 = vmatpush1.bf16.msra.mxu0 %v1676
      %1698 = vmatprep.subr.bf16.mxu0 0
      %1699 = vmatpush1.bf16.msra.mxu0 %v1677
      %1700 = vmatprep.subr.bf16.mxu0 0
      %1701 = vmatpush1.bf16.msra.mxu0 %v1678
      %1702 = vmatprep.subr.bf16.mxu0 0
      %1703 = vmatpush1.bf16.msra.mxu0 %v1679
      %1704 = vmatprep.subr.bf16.mxu0 0
      %1705 = vmatpush1.bf16.msra.mxu0 0
      %1706 = vmatprep.subr.bf16.mxu0 0
      %1707 = vmatpush1.bf16.msra.mxu0 0
      %1708 = vmatprep.subr.bf16.mxu0 0
      %1709 = vmatpush1.bf16.msra.mxu0 0
      %1710 = vmatprep.subr.bf16.mxu0 0
      %1711 = vmatpush1.bf16.msra.mxu0 0
      %1712 = vmatprep.subr.bf16.mxu0 0
      %1713 = vmatpush1.bf16.msra.mxu0 0
      %1714 = vmatprep.subr.bf16.mxu0 0
      %1715 = vmatpush1.bf16.msra.mxu0 0
      %1716 = vmatprep.subr.bf16.mxu0 0
      %1717 = vmatpush1.bf16.msra.mxu0 0
      %1718 = vmatprep.subr.bf16.mxu0 0
      %1719 = vmatpush1.bf16.msra.mxu0 0
      %1720 = vmatprep.subr.bf16.mxu0 0
      %1721 = vmatpush1.bf16.msra.mxu0 0
      %1722 = vmatprep.subr.bf16.mxu0 0
      %1723 = vmatpush1.bf16.msra.mxu0 0
      %1724 = vmatprep.subr.bf16.mxu0 0
      %1725 = vmatpush1.bf16.msra.mxu0 0
      %1726 = vmatprep.subr.bf16.mxu0 0
      %1727 = vmatpush1.bf16.msra.mxu0 0
      %1728 = vmatprep.mubr.bf16.mxu0 0
      %1729 = vmatmul.mubr.bf16.gmra.mrb[0].mxu0 %v1685
      %v1730 = vpop.f32.mrb[0].mxu0
      %v1731 = vadd.f32 0.0, %v1730
      %v1732 = vpop.f32.mrb[0].mxu0
      %v1733 = vpop.f32.mrb[0].mxu0
      %v1734 = vadd.f32 0.0, %v1733
      %v1735 = vpop.f32.mrb[0].mxu0
      %1736 = vmatprep.mubr.bf16.mxu0 0
      %1737 = vmatmul.mubr.bf16.gmra.mrb[0].mxu0 %v1688
      %v1738 = vpop.f32.mrb[0].mxu0
      %v1739 = vadd.f32 0.0, %v1738
      %v1740 = vpop.f32.mrb[0].mxu0
      %v1741 = vpop.f32.mrb[0].mxu0
      %v1742 = vadd.f32 0.0, %v1741
      %v1743 = vpop.f32.mrb[0].mxu0
      %1744 = vmatprep.mubr.bf16.mxu0 0
      %1745 = vmatmul.mubr.bf16.gmra.mrb[0].mxu0 %v1691
      %v1746 = vpop.f32.mrb[0].mxu0
      %v1747 = vadd.f32 0.0, %v1746
      %v1748 = vpop.f32.mrb[0].mxu0
      %v1749 = vpop.f32.mrb[0].mxu0
      %v1750 = vadd.f32 0.0, %v1749
      %v1751 = vpop.f32.mrb[0].mxu0
      %1752 = vmatprep.mubr.bf16.mxu0 0
      %1753 = vmatmul.mubr.bf16.gmra.mrb[0].mxu0 %v1694
      %v1754 = vpop.f32.mrb[0].mxu0
      %v1755 = vadd.f32 0.0, %v1754
      %v1756 = vpop.f32.mrb[0].mxu0
      %v1757 = vpop.f32.mrb[0].mxu0
      %v1758 = vadd.f32 0.0, %v1757
      %v1759 = vpop.f32.mrb[0].mxu0
      %1760 = vdwg.mxu0
      %v1761 = vadd.f32 %v1601, %v1731
      %v1762 = vadd.f32 %v1604, %v1734
      %v1763 = vadd.f32 %v1609, %v1739
      %v1764 = vadd.f32 %v1612, %v1742
      %v1765 = vadd.f32 %v1617, %v1747
      %v1766 = vadd.f32 %v1620, %v1750
      %v1767 = vadd.f32 %v1625, %v1755
      %v1768 = vadd.f32 %v1628, %v1758
      %v1769 = vld [vmem:[%s6] sm:$0x1]
      %v1771 = vlaneseq
      %v1772 = vshrl.u32 %v1771, 7
      %v1773 = vsub.s32 0, %v1772
      %v1774 = vrot.slane %v1769, %v1773
      %v1776 = vadd.f32 %v1761, %v1774
      %v1777 = vadd.f32 %v1762, %v1774
      %v1778 = vadd.f32 %v1763, %v1774
      %v1779 = vadd.f32 %v1764, %v1774
      %v1780 = vadd.f32 %v1765, %v1774
      %v1781 = vadd.f32 %v1766, %v1774
      %v1782 = vadd.f32 %v1767, %v1774
      %v1783 = vadd.f32 %v1768, %v1774
      %v1784 = vmax.f32 %v1776, 0.0
      %v1785 = vmax.f32 %v1777, 0.0
      %v1786 = vmax.f32 %v1778, 0.0
      %v1787 = vmax.f32 %v1779, 0.0
      %v1788 = vmax.f32 %v1780, 0.0
      %v1789 = vmax.f32 %v1781, 0.0
      %v1790 = vmax.f32 %v1782, 0.0
      %v1791 = vmax.f32 %v1783, 0.0
      %v1792 = vpack.c.bf16 %v1785, %v1784
      %v1793 = vpack.c.bf16 %v1787, %v1786
      %v1794 = vpack.c.bf16 %v1789, %v1788
      %v1795 = vpack.c.bf16 %v1791, %v1790
      %v1796 = vld [vmem:[%s7] sm:$0xf]
      %v1797 = vld [vmem:[%s7 + $0x4] sm:$0xf]
      %v1798 = vld [vmem:[%s7 + $0x8] sm:$0xf]
      %v1799 = vld [vmem:[%s7 + $0xc] sm:$0xf]
      %v1800 = vld [vmem:[%s7 + $0x10] sm:$0xf]
      %v1801 = vld [vmem:[%s7 + $0x14] sm:$0xf]
      %v1802 = vld [vmem:[%s7 + $0x18] sm:$0xf]
      %v1803 = vld [vmem:[%s7 + $0x1c] sm:$0xf]
      %v1804 = vld [vmem:[%s7 + $0x20] sm:$0xf]
      %v1805 = vld [vmem:[%s7 + $0x24] sm:$0xf]
      %v1806 = vld [vmem:[%s7 + $0x28] sm:$0xf]
      %v1807 = vld [vmem:[%s7 + $0x2c] sm:$0xf]
      %v1808 = vld [vmem:[%s7 + $0x30] sm:$0xf]
      %v1809 = vld [vmem:[%s7 + $0x34] sm:$0xf]
      %v1810 = vld [vmem:[%s7 + $0x38] sm:$0xf]
      %v1811 = vld [vmem:[%s7 + $0x3c] sm:$0xf]
      %v1812 = vrot.slane %v1784, 4
      %v1813 = vrot.slane %v1785, 4
      %v1814 = vrot.slane %v1786, 4
      %v1815 = vrot.slane %v1787, 4
      %v1816 = vrot.slane %v1788, 4
      %v1817 = vrot.slane %v1789, 4
      %v1818 = vrot.slane %v1790, 4
      %v1819 = vrot.slane %v1791, 4
      %v1820 = vsel %vm838, %v1818, %v1819
      %v1821 = vsel %vm838, %v1817, %v1818
      %v1822 = vsel %vm838, %v1816, %v1817
      %v1823 = vsel %vm838, %v1815, %v1816
      %v1824 = vsel %vm838, %v1814, %v1815
      %v1825 = vsel %vm838, %v1813, %v1814
      %v1826 = vsel %vm838, %v1812, %v1813
      %v1827 = vsel %vm838, %v1819, %v1812
      %v1828 = vpack.c.bf16 %v1825, %v1826
      %v1829 = vpack.c.bf16 %v1823, %v1824
      %v1830 = vpack.c.bf16 %v1821, %v1822
      %v1831 = vpack.c.bf16 %v1827, %v1820
      %s1832 = scalar_lea.vmem %s7, 64
      %v1833 = vld [vmem:[%s1832] sm:$0xf]
      %v1834 = vld [vmem:[%s1832 + $0x4] sm:$0xf]
      %v1835 = vld [vmem:[%s1832 + $0x8] sm:$0xf]
      %v1836 = vld [vmem:[%s1832 + $0xc] sm:$0xf]
      %v1837 = vld [vmem:[%s1832 + $0x10] sm:$0xf]
      %v1838 = vld [vmem:[%s1832 + $0x14] sm:$0xf]
      %v1839 = vld [vmem:[%s1832 + $0x18] sm:$0xf]
      %v1840 = vld [vmem:[%s1832 + $0x1c] sm:$0xf]
      %v1841 = vld [vmem:[%s1832 + $0x20] sm:$0xf]
      %v1842 = vld [vmem:[%s1832 + $0x24] sm:$0xf]
      %v1843 = vld [vmem:[%s1832 + $0x28] sm:$0xf]
      %v1844 = vld [vmem:[%s1832 + $0x2c] sm:$0xf]
      %v1845 = vld [vmem:[%s1832 + $0x30] sm:$0xf]
      %v1846 = vld [vmem:[%s1832 + $0x34] sm:$0xf]
      %v1847 = vld [vmem:[%s1832 + $0x38] sm:$0xf]
      %v1848 = vld [vmem:[%s1832 + $0x3c] sm:$0xf]
      %v1865 = vunpack.c.l.b16 %v1833
      %v1866 = vunpack.c.l.b16 %v1834
      %v1867 = vunpack.c.l.b16 %v1835
      %v1868 = vunpack.c.l.b16 %v1836
      %v1869 = vunpack.c.l.b16 %v1837
      %v1870 = vunpack.c.l.b16 %v1838
      %v1871 = vunpack.c.l.b16 %v1839
      %v1872 = vunpack.c.l.b16 %v1840
      %v1873 = vunpack.c.l.b16 %v1841
      %v1874 = vunpack.c.l.b16 %v1842
      %v1875 = vunpack.c.l.b16 %v1843
      %v1876 = vunpack.c.l.b16 %v1844
      %v1877 = vunpack.c.l.b16 %v1845
      %v1878 = vunpack.c.l.b16 %v1846
      %v1879 = vunpack.c.l.b16 %v1847
      %v1880 = vunpack.c.l.b16 %v1848
      %v1881 = vpack.c.b16 %v1866, %v1865
      %v1882 = vpack.c.b16 %v1868, %v1867
      %v1883 = vpack.c.b16 %v1870, %v1869
      %v1884 = vpack.c.b16 %v1872, %v1871
      %v1885 = vpack.c.b16 %v1874, %v1873
      %v1886 = vpack.c.b16 %v1876, %v1875
      %v1887 = vpack.c.b16 %v1878, %v1877
      %v1888 = vpack.c.b16 %v1880, %v1879
      %1897 = vmatprep.subr.bf16.mxu0 0
      %1898 = vmatpush1.bf16.msra.mxu0 %v1881
      %1899 = vmatprep.subr.bf16.mxu0 0
      %1900 = vmatpush1.bf16.msra.mxu0 %v1882
      %1901 = vmatprep.subr.bf16.mxu0 0
      %1902 = vmatpush1.bf16.msra.mxu0 %v1883
      %1903 = vmatprep.subr.bf16.mxu0 0
      %1904 = vmatpush1.bf16.msra.mxu0 %v1884
      %1905 = vmatprep.subr.bf16.mxu0 0
      %1906 = vmatpush1.bf16.msra.mxu0 %v1885
      %1907 = vmatprep.subr.bf16.mxu0 0
      %1908 = vmatpush1.bf16.msra.mxu0 %v1886
      %1909 = vmatprep.subr.bf16.mxu0 0
      %1910 = vmatpush1.bf16.msra.mxu0 %v1887
      %1911 = vmatprep.subr.bf16.mxu0 0
      %1912 = vmatpush1.bf16.msra.mxu0 %v1888
      %1913 = vmatprep.subr.bf16.mxu0 0
      %1914 = vmatpush1.bf16.msra.mxu0 0
      %1915 = vmatprep.subr.bf16.mxu0 0
      %1916 = vmatpush1.bf16.msra.mxu0 0
      %1917 = vmatprep.subr.bf16.mxu0 0
      %1918 = vmatpush1.bf16.msra.mxu0 0
      %1919 = vmatprep.subr.bf16.mxu0 0
      %1920 = vmatpush1.bf16.msra.mxu0 0
      %1921 = vmatprep.subr.bf16.mxu0 0
      %1922 = vmatpush1.bf16.msra.mxu0 0
      %1923 = vmatprep.subr.bf16.mxu0 0
      %1924 = vmatpush1.bf16.msra.mxu0 0
      %1925 = vmatprep.subr.bf16.mxu0 0
      %1926 = vmatpush1.bf16.msra.mxu0 0
      %1927 = vmatprep.subr.bf16.mxu0 0
      %1928 = vmatpush1.bf16.msra.mxu0 0
      %1929 = vmatprep.mubr.bf16.mxu0 0
      %1930 = vmatmul.mubr.bf16.gmra.mrb[0].mxu0 %v1828
      %v1931 = vpop.f32.mrb[0].mxu0
      %v1932 = vadd.f32 0.0, %v1931
      %v1933 = vpop.f32.mrb[0].mxu0
      %v1934 = vpop.f32.mrb[0].mxu0
      %v1935 = vadd.f32 0.0, %v1934
      %v1936 = vpop.f32.mrb[0].mxu0
      %1937 = vmatprep.mubr.bf16.mxu0 0
      %1938 = vmatmul.mubr.bf16.gmra.mrb[0].mxu0 %v1829
      %v1939 = vpop.f32.mrb[0].mxu0
      %v1940 = vadd.f32 0.0, %v1939
      %v1941 = vpop.f32.mrb[0].mxu0
      %v1942 = vpop.f32.mrb[0].mxu0
      %v1943 = vadd.f32 0.0, %v1942
      %v1944 = vpop.f32.mrb[0].mxu0
      %1945 = vmatprep.mubr.bf16.mxu0 0
      %1946 = vmatmul.mubr.bf16.gmra.mrb[0].mxu0 %v1830
      %v1947 = vpop.f32.mrb[0].mxu0
      %v1948 = vadd.f32 0.0, %v1947
      %v1949 = vpop.f32.mrb[0].mxu0
      %v1950 = vpop.f32.mrb[0].mxu0
      %v1951 = vadd.f32 0.0, %v1950
      %v1952 = vpop.f32.mrb[0].mxu0
      %1953 = vmatprep.mubr.bf16.mxu0 0
      %1954 = vmatmul.mubr.bf16.gmra.mrb[0].mxu0 %v1831
      %v1955 = vpop.f32.mrb[0].mxu0
      %v1956 = vadd.f32 0.0, %v1955
      %v1957 = vpop.f32.mrb[0].mxu0
      %v1958 = vpop.f32.mrb[0].mxu0
      %v1959 = vadd.f32 0.0, %v1958
      %v1960 = vpop.f32.mrb[0].mxu0
      %1961 = vdwg.mxu0
      %v1978 = vunpack.c.l.b16 %v1796
      %v1979 = vunpack.c.l.b16 %v1797
      %v1980 = vunpack.c.l.b16 %v1798
      %v1981 = vunpack.c.l.b16 %v1799
      %v1982 = vunpack.c.l.b16 %v1800
      %v1983 = vunpack.c.l.b16 %v1801
      %v1984 = vunpack.c.l.b16 %v1802
      %v1985 = vunpack.c.l.b16 %v1803
      %v1986 = vunpack.c.l.b16 %v1804
      %v1987 = vunpack.c.l.b16 %v1805
      %v1988 = vunpack.c.l.b16 %v1806
      %v1989 = vunpack.c.l.b16 %v1807
      %v1990 = vunpack.c.l.b16 %v1808
      %v1991 = vunpack.c.l.b16 %v1809
      %v1992 = vunpack.c.l.b16 %v1810
      %v1993 = vunpack.c.l.b16 %v1811
      %v1994 = vpack.c.b16 %v1979, %v1978
      %v1995 = vpack.c.b16 %v1981, %v1980
      %v1996 = vpack.c.b16 %v1983, %v1982
      %v1997 = vpack.c.b16 %v1985, %v1984
      %v1998 = vpack.c.b16 %v1987, %v1986
      %v1999 = vpack.c.b16 %v1989, %v1988
      %v2000 = vpack.c.b16 %v1991, %v1990
      %v2001 = vpack.c.b16 %v1993, %v1992
      %2010 = vmatprep.subr.bf16.mxu0 0
      %2011 = vmatpush1.bf16.msra.mxu0 %v1994
      %2012 = vmatprep.subr.bf16.mxu0 0
      %2013 = vmatpush1.bf16.msra.mxu0 %v1995
      %2014 = vmatprep.subr.bf16.mxu0 0
      %2015 = vmatpush1.bf16.msra.mxu0 %v1996
      %2016 = vmatprep.subr.bf16.mxu0 0
      %2017 = vmatpush1.bf16.msra.mxu0 %v1997
      %2018 = vmatprep.subr.bf16.mxu0 0
      %2019 = vmatpush1.bf16.msra.mxu0 %v1998
      %2020 = vmatprep.subr.bf16.mxu0 0
      %2021 = vmatpush1.bf16.msra.mxu0 %v1999
      %2022 = vmatprep.subr.bf16.mxu0 0
      %2023 = vmatpush1.bf16.msra.mxu0 %v2000
      %2024 = vmatprep.subr.bf16.mxu0 0
      %2025 = vmatpush1.bf16.msra.mxu0 %v2001
      %2026 = vmatprep.subr.bf16.mxu0 0
      %2027 = vmatpush1.bf16.msra.mxu0 0
      %2028 = vmatprep.subr.bf16.mxu0 0
      %2029 = vmatpush1.bf16.msra.mxu0 0
      %2030 = vmatprep.subr.bf16.mxu0 0
      %2031 = vmatpush1.bf16.msra.mxu0 0
      %2032 = vmatprep.subr.bf16.mxu0 0
      %2033 = vmatpush1.bf16.msra.mxu0 0
      %2034 = vmatprep.subr.bf16.mxu0 0
      %2035 = vmatpush1.bf16.msra.mxu0 0
      %2036 = vmatprep.subr.bf16.mxu0 0
      %2037 = vmatpush1.bf16.msra.mxu0 0
      %2038 = vmatprep.subr.bf16.mxu0 0
      %2039 = vmatpush1.bf16.msra.mxu0 0
      %2040 = vmatprep.subr.bf16.mxu0 0
      %2041 = vmatpush1.bf16.msra.mxu0 0
      %2042 = vmatprep.mubr.bf16.mxu0 0
      %2043 = vmatmul.mubr.bf16.gmra.mrb[0].mxu0 %v1792
      %v2044 = vpop.f32.mrb[0].mxu0
      %v2045 = vadd.f32 %v1932, %v2044
      %v2046 = vpop.f32.mrb[0].mxu0
      %v2047 = vpop.f32.mrb[0].mxu0
      %v2048 = vadd.f32 %v1935, %v2047
      %v2049 = vpop.f32.mrb[0].mxu0
      %2050 = vmatprep.mubr.bf16.mxu0 0
      %2051 = vmatmul.mubr.bf16.gmra.mrb[0].mxu0 %v1793
      %v2052 = vpop.f32.mrb[0].mxu0
      %v2053 = vadd.f32 %v1940, %v2052
      %v2054 = vpop.f32.mrb[0].mxu0
      %v2055 = vpop.f32.mrb[0].mxu0
      %v2056 = vadd.f32 %v1943, %v2055
      %v2057 = vpop.f32.mrb[0].mxu0
      %2058 = vmatprep.mubr.bf16.mxu0 0
      %2059 = vmatmul.mubr.bf16.gmra.mrb[0].mxu0 %v1794
      %v2060 = vpop.f32.mrb[0].mxu0
      %v2061 = vadd.f32 %v1948, %v2060
      %v2062 = vpop.f32.mrb[0].mxu0
      %v2063 = vpop.f32.mrb[0].mxu0
      %v2064 = vadd.f32 %v1951, %v2063
      %v2065 = vpop.f32.mrb[0].mxu0
      %2066 = vmatprep.mubr.bf16.mxu0 0
      %2067 = vmatmul.mubr.bf16.gmra.mrb[0].mxu0 %v1795
      %v2068 = vpop.f32.mrb[0].mxu0
      %v2069 = vadd.f32 %v1956, %v2068
      %v2070 = vpop.f32.mrb[0].mxu0
      %v2071 = vpop.f32.mrb[0].mxu0
      %v2072 = vadd.f32 %v1959, %v2071
      %v2073 = vpop.f32.mrb[0].mxu0
      %2074 = vdwg.mxu0
      %v2075 = vpack.c.bf16 %v1786, %v1785
      %v2076 = vpack.c.bf16 %v1788, %v1787
      %v2077 = vpack.c.bf16 %v1790, %v1789
      %v2078 = vpack.c.bf16 %v1784, %v1791
      %s2079 = scalar_lea.vmem %s7, 128
      %v2080 = vld [vmem:[%s2079] sm:$0xf]
      %v2081 = vld [vmem:[%s2079 + $0x4] sm:$0xf]
      %v2082 = vld [vmem:[%s2079 + $0x8] sm:$0xf]
      %v2083 = vld [vmem:[%s2079 + $0xc] sm:$0xf]
      %v2084 = vld [vmem:[%s2079 + $0x10] sm:$0xf]
      %v2085 = vld [vmem:[%s2079 + $0x14] sm:$0xf]
      %v2086 = vld [vmem:[%s2079 + $0x18] sm:$0xf]
      %v2087 = vld [vmem:[%s2079 + $0x1c] sm:$0xf]
      %v2088 = vld [vmem:[%s2079 + $0x20] sm:$0xf]
      %v2089 = vld [vmem:[%s2079 + $0x24] sm:$0xf]
      %v2090 = vld [vmem:[%s2079 + $0x28] sm:$0xf]
      %v2091 = vld [vmem:[%s2079 + $0x2c] sm:$0xf]
      %v2092 = vld [vmem:[%s2079 + $0x30] sm:$0xf]
      %v2093 = vld [vmem:[%s2079 + $0x34] sm:$0xf]
      %v2094 = vld [vmem:[%s2079 + $0x38] sm:$0xf]
      %v2095 = vld [vmem:[%s2079 + $0x3c] sm:$0xf]
      %v2112 = vunpack.c.l.b16 %v2080
      %v2113 = vunpack.c.l.b16 %v2081
      %v2114 = vunpack.c.l.b16 %v2082
      %v2115 = vunpack.c.l.b16 %v2083
      %v2116 = vunpack.c.l.b16 %v2084
      %v2117 = vunpack.c.l.b16 %v2085
      %v2118 = vunpack.c.l.b16 %v2086
      %v2119 = vunpack.c.l.b16 %v2087
      %v2120 = vunpack.c.l.b16 %v2088
      %v2121 = vunpack.c.l.b16 %v2089
      %v2122 = vunpack.c.l.b16 %v2090
      %v2123 = vunpack.c.l.b16 %v2091
      %v2124 = vunpack.c.l.b16 %v2092
      %v2125 = vunpack.c.l.b16 %v2093
      %v2126 = vunpack.c.l.b16 %v2094
      %v2127 = vunpack.c.l.b16 %v2095
      %v2128 = vpack.c.b16 %v2113, %v2112
      %v2129 = vpack.c.b16 %v2115, %v2114
      %v2130 = vpack.c.b16 %v2117, %v2116
      %v2131 = vpack.c.b16 %v2119, %v2118
      %v2132 = vpack.c.b16 %v2121, %v2120
      %v2133 = vpack.c.b16 %v2123, %v2122
      %v2134 = vpack.c.b16 %v2125, %v2124
      %v2135 = vpack.c.b16 %v2127, %v2126
      %2144 = vmatprep.subr.bf16.mxu0 0
      %2145 = vmatpush1.bf16.msra.mxu0 %v2128
      %2146 = vmatprep.subr.bf16.mxu0 0
      %2147 = vmatpush1.bf16.msra.mxu0 %v2129
      %2148 = vmatprep.subr.bf16.mxu0 0
      %2149 = vmatpush1.bf16.msra.mxu0 %v2130
      %2150 = vmatprep.subr.bf16.mxu0 0
      %2151 = vmatpush1.bf16.msra.mxu0 %v2131
      %2152 = vmatprep.subr.bf16.mxu0 0
      %2153 = vmatpush1.bf16.msra.mxu0 %v2132
      %2154 = vmatprep.subr.bf16.mxu0 0
      %2155 = vmatpush1.bf16.msra.mxu0 %v2133
      %2156 = vmatprep.subr.bf16.mxu0 0
      %2157 = vmatpush1.bf16.msra.mxu0 %v2134
      %2158 = vmatprep.subr.bf16.mxu0 0
      %2159 = vmatpush1.bf16.msra.mxu0 %v2135
      %2160 = vmatprep.subr.bf16.mxu0 0
      %2161 = vmatpush1.bf16.msra.mxu0 0
      %2162 = vmatprep.subr.bf16.mxu0 0
      %2163 = vmatpush1.bf16.msra.mxu0 0
      %2164 = vmatprep.subr.bf16.mxu0 0
      %2165 = vmatpush1.bf16.msra.mxu0 0
      %2166 = vmatprep.subr.bf16.mxu0 0
      %2167 = vmatpush1.bf16.msra.mxu0 0
      %2168 = vmatprep.subr.bf16.mxu0 0
      %2169 = vmatpush1.bf16.msra.mxu0 0
      %2170 = vmatprep.subr.bf16.mxu0 0
      %2171 = vmatpush1.bf16.msra.mxu0 0
      %2172 = vmatprep.subr.bf16.mxu0 0
      %2173 = vmatpush1.bf16.msra.mxu0 0
      %2174 = vmatprep.subr.bf16.mxu0 0
      %2175 = vmatpush1.bf16.msra.mxu0 0
      %2176 = vmatprep.mubr.bf16.mxu0 0
      %2177 = vmatmul.mubr.bf16.gmra.mrb[0].mxu0 %v2075
      %v2178 = vpop.f32.mrb[0].mxu0
      %v2179 = vadd.f32 0.0, %v2178
      %v2180 = vpop.f32.mrb[0].mxu0
      %v2181 = vpop.f32.mrb[0].mxu0
      %v2182 = vadd.f32 0.0, %v2181
      %v2183 = vpop.f32.mrb[0].mxu0
      %2184 = vmatprep.mubr.bf16.mxu0 0
      %2185 = vmatmul.mubr.bf16.gmra.mrb[0].mxu0 %v2076
      %v2186 = vpop.f32.mrb[0].mxu0
      %v2187 = vadd.f32 0.0, %v2186
      %v2188 = vpop.f32.mrb[0].mxu0
      %v2189 = vpop.f32.mrb[0].mxu0
      %v2190 = vadd.f32 0.0, %v2189
      %v2191 = vpop.f32.mrb[0].mxu0
      %2192 = vmatprep.mubr.bf16.mxu0 0
      %2193 = vmatmul.mubr.bf16.gmra.mrb[0].mxu0 %v2077
      %v2194 = vpop.f32.mrb[0].mxu0
      %v2195 = vadd.f32 0.0, %v2194
      %v2196 = vpop.f32.mrb[0].mxu0
      %v2197 = vpop.f32.mrb[0].mxu0
      %v2198 = vadd.f32 0.0, %v2197
      %v2199 = vpop.f32.mrb[0].mxu0
      %2200 = vmatprep.mubr.bf16.mxu0 0
      %2201 = vmatmul.mubr.bf16.gmra.mrb[0].mxu0 %v2078
      %v2202 = vpop.f32.mrb[0].mxu0
      %v2203 = vadd.f32 0.0, %v2202
      %v2204 = vpop.f32.mrb[0].mxu0
      %v2205 = vpop.f32.mrb[0].mxu0
      %v2206 = vadd.f32 0.0, %v2205
      %v2207 = vpop.f32.mrb[0].mxu0
      %2208 = vdwg.mxu0
      %v2209 = vadd.f32 %v2045, %v2179
      %v2210 = vadd.f32 %v2048, %v2182
      %v2211 = vadd.f32 %v2053, %v2187
      %v2212 = vadd.f32 %v2056, %v2190
      %v2213 = vadd.f32 %v2061, %v2195
      %v2214 = vadd.f32 %v2064, %v2198
      %v2215 = vadd.f32 %v2069, %v2203
      %v2216 = vadd.f32 %v2072, %v2206
      %v2217 = vld [vmem:[%s8] sm:$0x1]
      %v2219 = vlaneseq
      %v2220 = vshrl.u32 %v2219, 7
      %v2221 = vsub.s32 0, %v2220
      %v2222 = vrot.slane %v2217, %v2221
      %v2224 = vadd.f32 %v2209, %v2222
      %v2225 = vadd.f32 %v2210, %v2222
      %v2226 = vadd.f32 %v2211, %v2222
      %v2227 = vadd.f32 %v2212, %v2222
      %v2228 = vadd.f32 %v2213, %v2222
      %v2229 = vadd.f32 %v2214, %v2222
      %v2230 = vadd.f32 %v2215, %v2222
      %v2231 = vadd.f32 %v2216, %v2222
      %v2232 = vmax.f32 %v2224, 0.0
      %v2233 = vmax.f32 %v2225, 0.0
      %v2234 = vmax.f32 %v2226, 0.0
      %v2235 = vmax.f32 %v2227, 0.0
      %v2236 = vmax.f32 %v2228, 0.0
      %v2237 = vmax.f32 %v2229, 0.0
      %v2238 = vmax.f32 %v2230, 0.0
      %v2239 = vmax.f32 %v2231, 0.0
      %v2240 = vadd.s32 %v358, 8
      %v2241 = vadd.s32 %v358, 16
      %v2242 = vadd.s32 %v358, 24
      %v2243 = vadd.s32 %v358, 32
      %v2244 = vadd.s32 %v358, 40
      %v2245 = vadd.s32 %v358, 48
      %v2246 = vadd.s32 %v358, 56
      %vm2247 = vcmp.lt.s32.totalorder %v358, 44
      %vm2248 = vcmp.lt.s32.totalorder %v2240, 44
      %vm2249 = vcmp.lt.s32.totalorder %v2241, 44
      %vm2250 = vcmp.lt.s32.totalorder %v2242, 44
      %vm2251 = vcmp.lt.s32.totalorder %v2243, 44
      %vm2252 = vcmp.lt.s32.totalorder %v2244, 44
      %vm2253 = vcmp.lt.s32.totalorder %v2245, 44
      %vm2254 = vcmp.lt.s32.totalorder %v2246, 44
      %v2255 = vand.u32 %v358, 7
      %v2256 = vand.u32 %v2240, 7
      %v2257 = vand.u32 %v2241, 7
      %v2258 = vand.u32 %v2242, 7
      %v2259 = vand.u32 %v2243, 7
      %v2260 = vand.u32 %v2244, 7
      %v2261 = vand.u32 %v2245, 7
      %v2262 = vand.u32 %v2246, 7
      %vm2263 = vcmp.eq.s32.totalorder %v2255, 0
      %vm2264 = vcmp.eq.s32.totalorder %v2256, 0
      %vm2265 = vcmp.eq.s32.totalorder %v2257, 0
      %vm2266 = vcmp.eq.s32.totalorder %v2258, 0
      %vm2267 = vcmp.eq.s32.totalorder %v2259, 0
      %vm2268 = vcmp.eq.s32.totalorder %v2260, 0
      %vm2269 = vcmp.eq.s32.totalorder %v2261, 0
      %vm2270 = vcmp.eq.s32.totalorder %v2262, 0
      %vm2271 = vmand %vm2247, %vm2263
      %vm2272 = vmand %vm2248, %vm2264
      %vm2273 = vmand %vm2249, %vm2265
      %vm2274 = vmand %vm2250, %vm2266
      %vm2275 = vmand %vm2251, %vm2267
      %vm2276 = vmand %vm2252, %vm2268
      %vm2277 = vmand %vm2253, %vm2269
      %vm2278 = vmand %vm2254, %vm2270
      %vm2279 = vcmp.lt.s32.totalorder %v358, 52
      %vm2280 = vcmp.lt.s32.totalorder %v2240, 52
      %vm2281 = vcmp.lt.s32.totalorder %v2241, 52
      %vm2282 = vcmp.lt.s32.totalorder %v2242, 52
      %vm2283 = vcmp.lt.s32.totalorder %v2243, 52
      %vm2284 = vcmp.lt.s32.totalorder %v2244, 52
      %vm2285 = vcmp.lt.s32.totalorder %v2245, 52
      %vm2286 = vcmp.lt.s32.totalorder %v2246, 52
      %v2287 = vand.u32 %v358, 3
      %v2288 = vand.u32 %v2240, 3
      %v2289 = vand.u32 %v2241, 3
      %v2290 = vand.u32 %v2242, 3
      %v2291 = vand.u32 %v2243, 3
      %v2292 = vand.u32 %v2244, 3
      %v2293 = vand.u32 %v2245, 3
      %v2294 = vand.u32 %v2246, 3
      %vm2295 = vcmp.eq.s32.totalorder %v2287, 0
      %vm2296 = vcmp.eq.s32.totalorder %v2288, 0
      %vm2297 = vcmp.eq.s32.totalorder %v2289, 0
      %vm2298 = vcmp.eq.s32.totalorder %v2290, 0
      %vm2299 = vcmp.eq.s32.totalorder %v2291, 0
      %vm2300 = vcmp.eq.s32.totalorder %v2292, 0
      %vm2301 = vcmp.eq.s32.totalorder %v2293, 0
      %vm2302 = vcmp.eq.s32.totalorder %v2294, 0
      %vm2303 = vmand %vm2279, %vm2295
      %vm2304 = vmand %vm2280, %vm2296
      %vm2305 = vmand %vm2281, %vm2297
      %vm2306 = vmand %vm2282, %vm2298
      %vm2307 = vmand %vm2283, %vm2299
      %vm2308 = vmand %vm2284, %vm2300
      %vm2309 = vmand %vm2285, %vm2301
      %vm2310 = vmand %vm2286, %vm2302
      %v2311 = vsel %vm2271, 1, 0
      %v2312 = vsel %vm2272, 1, 0
      %v2313 = vsel %vm2273, 1, 0
      %v2314 = vsel %vm2274, 1, 0
      %v2315 = vsel %vm2275, 1, 0
      %v2316 = vsel %vm2276, 1, 0
      %v2317 = vsel %vm2277, 1, 0
      %v2318 = vsel %vm2278, 1, 0
      %vm2319 = vcmp.eq.s32.totalorder %v2311, 1
      %vm2320 = vcmp.eq.s32.totalorder %v2312, 1
      %vm2321 = vcmp.eq.s32.totalorder %v2313, 1
      %vm2322 = vcmp.eq.s32.totalorder %v2314, 1
      %vm2323 = vcmp.eq.s32.totalorder %v2315, 1
      %vm2324 = vcmp.eq.s32.totalorder %v2316, 1
      %vm2325 = vcmp.eq.s32.totalorder %v2317, 1
      %vm2326 = vcmp.eq.s32.totalorder %v2318, 1
      %v2327 = vsel %vm2319, %v2232, -1e+30
      %v2328 = vsel %vm2320, %v2233, -1e+30
      %v2329 = vsel %vm2321, %v2234, -1e+30
      %v2330 = vsel %vm2322, %v2235, -1e+30
      %v2331 = vsel %vm2323, %v2236, -1e+30
      %v2332 = vsel %vm2324, %v2237, -1e+30
      %v2333 = vsel %vm2325, %v2238, -1e+30
      %v2334 = vsel %vm2326, %v2239, -1e+30
      %v2335 = vsel %vm1048, %v2327, -inf
      %v2336 = vsel %vm1048, %v2328, -inf
      %v2337 = vsel %vm1048, %v2329, -inf
      %v2338 = vsel %vm1048, %v2330, -inf
      %v2339 = vsel %vm1048, %v2331, -inf
      %v2340 = vmax.f32 %v2335, %v2339
      %v2341 = vsel %vm1048, %v2332, -inf
      %v2342 = vmax.f32 %v2336, %v2341
      %v2343 = vsel %vm1048, %v2333, -inf
      %v2344 = vmax.f32 %v2337, %v2343
      %v2345 = vsel %vm1048, %v2334, -inf
      %v2346 = vmax.f32 %v2338, %v2345
      %v2347 = vmax.f32 %v2340, %v2342
      %v2348 = vmax.f32 %v2344, %v2346
      %v2349 = vmax.f32 %v2347, %v2348
      %v2350 = vrot.slane %v2349, 4
      %v2351 = vmax.f32 %v2349, %v2350
      %v2352 = vrot.slane %v2351, 2
      %v2353 = vmax.f32 %v2351, %v2352
      %v2354 = vrot.slane %v2353, 1
      %v2355 = vmax.f32 %v2353, %v2354
      %v2356 = vsel %vm2303, 1, 0
      %v2357 = vsel %vm2304, 1, 0
      %v2358 = vsel %vm2305, 1, 0
      %v2359 = vsel %vm2306, 1, 0
      %v2360 = vsel %vm2307, 1, 0
      %v2361 = vsel %vm2308, 1, 0
      %v2362 = vsel %vm2309, 1, 0
      %v2363 = vsel %vm2310, 1, 0
      %vm2364 = vcmp.eq.s32.totalorder %v2356, 1
      %vm2365 = vcmp.eq.s32.totalorder %v2357, 1
      %vm2366 = vcmp.eq.s32.totalorder %v2358, 1
      %vm2367 = vcmp.eq.s32.totalorder %v2359, 1
      %vm2368 = vcmp.eq.s32.totalorder %v2360, 1
      %vm2369 = vcmp.eq.s32.totalorder %v2361, 1
      %vm2370 = vcmp.eq.s32.totalorder %v2362, 1
      %vm2371 = vcmp.eq.s32.totalorder %v2363, 1
      %v2372 = vsel %vm2364, %v1784, -1e+30
      %v2373 = vsel %vm2365, %v1785, -1e+30
      %v2374 = vsel %vm2366, %v1786, -1e+30
      %v2375 = vsel %vm2367, %v1787, -1e+30
      %v2376 = vsel %vm2368, %v1788, -1e+30
      %v2377 = vsel %vm2369, %v1789, -1e+30
      %v2378 = vsel %vm2370, %v1790, -1e+30
      %v2379 = vsel %vm2371, %v1791, -1e+30
      %v2380 = vmax.f32 %v2372, %v2376
      %v2381 = vmax.f32 %v2373, %v2377
      %v2382 = vmax.f32 %v2374, %v2378
      %v2383 = vmax.f32 %v2375, %v2379
      %v2384 = vmax.f32 %v2380, %v2381
      %v2385 = vmax.f32 %v2382, %v2383
      %v2386 = vmax.f32 %v2384, %v2385
      %v2387 = vrot.slane %v2386, 4
      %v2388 = vmax.f32 %v2386, %v2387
      %v2389 = vrot.slane %v2388, 2
      %v2390 = vmax.f32 %v2388, %v2389
      %v2391 = vrot.slane %v2390, 1
      %v2392 = vmax.f32 %v2390, %v2391
      %2394 = vrot.lane.b32.xlu0 %v2392, 32
      %v2395 = vpop.permute.xlu0 %2394
      %v2397 = vsel %vm1048, %v2355, %v2395
      %v2399 = vcombine.low %v2397, %v2395
      %v2401 = vunpack.c.l.s4 1966171168
      %v2402 = vunpack.c.0.s8 %v2401
      %v2403 = vlaneseq
      %v2404 = vshrl.u32 %v2403, 7
      %v2405 = vsub.s32 %v2402, %v2404
      %v2406 = vrot.slane %v2399, %v2405
      %v2408 = vunpack.c.l.s4 1966171168
      %v2409 = vunpack.c.0.s8 %v2408
      %v2410 = vlaneseq
      %v2411 = vshrl.u32 %v2410, 7
      %v2412 = vsub.s32 %v2409, %v2411
      %v2413 = vrot.slane %v2406, %v2412
      %v2415 = vlaneseq
      %vm2416 = vcmp.ge.s32.totalorder %v2415, 0
      %vm2417 = vcmp.lt.s32.totalorder %v2415, 160
      %vm2418 = vmand %vm2416, %vm2417
      %2419 = vst.msk [vmem:[%s330] sm:$0x3] %vm2418, %v2413
      %p2420 = scmp.lt.s32.totalorder %s20, 1
      %s2421 = scalar_select %p2420, %s20, 1
      %s2422 = smul.addr %s2421, 2
      %s2423 = scalar_lea.vmem %s9, %s2422
      // Predicated region
      $region57: #{my_cnn_model_forward.1} parent=55 // pred_check
        %p2424 = pneg %p232
      $region58: #{my_cnn_model_forward.1} parent=55 // pred_check_branch
        %2426 = sbr.rel (%p2424) target = $region60
      $region59: #{my_cnn_model_forward.1} parent=55 // pred_region
        _
      $region60: #{my_cnn_model_forward.1} parent=55 // pred_fallthru
        _
    $region56: #{my_cnn_model_forward.1} parent=5 // pred_fallthru
      _
    %p2427 = scmp.le.s32.totalorder 2, %s15
    // Predicated region
    $region61: #{my_cnn_model_forward.1} parent=5 // pred_check
      %p2428 = pneg %p2427
    $region62: #{my_cnn_model_forward.1} parent=5 // pred_check_branch
      %2430 = sbr.rel (%p2428) target = $region64
    $region63: #{my_cnn_model_forward.1} parent=5 // pred_region
      %s2431 = ssub.s32 %s15, 2
      // Predicated region
      $region65: #{my_cnn_model_forward.1} parent=63 // pred_check
        %p2432 = pneg %p238
      $region66: #{my_cnn_model_forward.1} parent=63 // pred_check_branch
        %2434 = sbr.rel (%p2432) target = $region68
      $region67: #{my_cnn_model_forward.1} parent=63 // pred_region
        %p2435 = scmp.lt.s32.totalorder %s21, 1
        %s2436 = scalar_select %p2435, %s21, 1
        %s2437 = smul.addr %s2436, 2
        %s2438 = scalar_lea.vmem %s9, %s2437
      $region68: #{my_cnn_model_forward.1} parent=63 // pred_fallthru
        _
    $region64: #{my_cnn_model_forward.1} parent=5 // pred_fallthru
      _
  $region6: #{my_cnn_model_forward.1} parent=0 // loop_footer
    %s19 = sadd.s32 1, %s15
  $region7: #{my_cnn_model_forward.1} parent=0 // loop_footer_branch
    %14 = sbr.rel target = $region3
  $region8: #{my_cnn_model_forward.1} parent=0 // loop_exit
    _

</llo_original>
